<compile_context>
chip_gen: v6e
topology: v6e:2x2x1
jax: 0.10.0
libtpu: 0.0.40
codegen_flags: <defaults>
</compile_context>

<pallas_src>
import math

import numpy as np

import jax
import jax.numpy as jnp
from jax import lax
from jax.experimental import pallas as pl
from jax.experimental.pallas import tpu as pltpu

# ---- problem sizes (small, consistent with the module) ----
B = 2             # batch
L = 16            # sequence length
D_MODEL = 32      # model dim
N_HEADS = 8       # fixed by EncoderLayer (n_heads=8)
D_HEAD = D_MODEL // N_HEADS
D_FF = 4 * D_MODEL    # default d_ff
EPS = 1e-5            # nn.LayerNorm default
HL = N_HEADS * L      # 128 (head-major replicated key axis, lane-dense)
N = B * L             # 32  (flattened token count)
SCALE = 1.0 / math.sqrt(D_HEAD)

# ---- host-side constant masks (become constant VMEM data inside the slabs) ----
_head_of_rep = np.arange(HL) // L               # head index of replicated index r = h*L + j
_head_of_chan = np.arange(D_MODEL) // D_HEAD    # head index of channel d
HMASK_NP = (_head_of_rep[:, None] == _head_of_chan[None, :]).astype(np.float32)   # (HL, D)
HMASK_T_NP = np.ascontiguousarray(HMASK_NP.T)                                      # (D, HL)

# row offsets inside the packed slabs
# wide slab  (width 128): [w_qkv_pad(32) | w1(32) | hmask_t(32) | b_qkv_pad(1) | b1(1)]
WR_QKV, WR_W1, WR_HMT, WR_BQKV, WR_B1, W_ROWS = 0, 32, 64, 96, 97, 98
# narrow slab (width 32): [wo(32) | w2(128) | hmask(128) | bo,b2,g1,be1,g2,be2 (6)]
NR_WO, NR_W2, NR_HM, NR_VEC, N_ROWS = 0, 32, 160, 288, 294


def _layernorm(x, gamma, beta):
    mu = jnp.mean(x, axis=-1, keepdims=True)
    var = jnp.mean((x - mu) ** 2, axis=-1, keepdims=True)
    return (x - mu) * lax.rsqrt(var + EPS) * gamma + beta


def encoder_layer_kernel(x_ref, wide_ref, nar_ref, out_ref):
    f32 = jnp.float32
    x = x_ref[...]                                    # (N, D_MODEL) = (32, 32)

    # --- unpack packed parameter slabs (static slices, no data movement) ---
    w_qkv = wide_ref[WR_QKV:WR_QKV + D_MODEL, :]      # (32, 128) = [wq | wk | wv | 0]
    w1 = wide_ref[WR_W1:WR_W1 + D_MODEL, :]           # (32, 128)
    hmaskt = wide_ref[WR_HMT:WR_HMT + D_MODEL, :]     # (32, 128) constant head mask^T
    b_qkv = wide_ref[WR_BQKV:WR_BQKV + 1, :]          # (1, 128)
    b1 = wide_ref[WR_B1:WR_B1 + 1, :]                 # (1, 128)

    wo = nar_ref[NR_WO:NR_WO + D_MODEL, :]            # (32, 32)
    w2 = nar_ref[NR_W2:NR_W2 + D_FF, :]               # (128, 32)
    hmask = nar_ref[NR_HM:NR_HM + HL, :]              # (128, 32) constant head mask
    bo = nar_ref[NR_VEC + 0:NR_VEC + 1, :]
    b2 = nar_ref[NR_VEC + 1:NR_VEC + 2, :]
    g1 = nar_ref[NR_VEC + 2:NR_VEC + 3, :]
    be1 = nar_ref[NR_VEC + 3:NR_VEC + 4, :]
    g2 = nar_ref[NR_VEC + 4:NR_VEC + 5, :]
    be2 = nar_ref[NR_VEC + 5:NR_VEC + 6, :]

    # --- fused Q/K/V projection: one lane-full (32,128) MXU pass ---
    qkv = jnp.dot(x, w_qkv, preferred_element_type=f32) + b_qkv      # (32, 128)
    q = qkv[:, 0:D_MODEL] * SCALE
    k = qkv[:, D_MODEL:2 * D_MODEL]
    v = qkv[:, 2 * D_MODEL:3 * D_MODEL]

    # --- all-heads attention with lane-dense transposed K replica ---
    q3 = q.reshape(B, L, D_MODEL)                                    # (B, L, D)
    k3t = jnp.transpose(k.reshape(B, L, D_MODEL), (0, 2, 1))         # (B, D, L)  one small transpose
    krt = jnp.concatenate([k3t] * N_HEADS, axis=2) * hmaskt          # (B, D, HL) lane-dense, masked
    v3 = v.reshape(B, L, D_MODEL)
    vrep = jnp.concatenate([v3] * N_HEADS, axis=1) * hmask           # (B, HL, D)

    # scores: MXU-native (M,K)x(K,N) batched matmul
    # s[b, i, h*L+j] = <q_h[b,i], k_h[b,j]> * scale  (masked channels contribute 0)
    s = jnp.einsum("bld,bdr->blr", q3, krt, preferred_element_type=f32)   # (B, L, HL)
    s2 = s.reshape(N, HL)                                            # (32, 128)
    # global (over-heads) row max is a per-row constant -> each head's softmax unchanged.
    p2 = jnp.exp(s2 - jnp.max(s2, axis=-1, keepdims=True))           # (32, 128)
    # per-head denominators broadcast to that head's channels via one matmul
    denom = jnp.dot(p2, hmask, preferred_element_type=f32)           # (32, 32)
    o_un = jnp.einsum("blr,brd->bld", p2.reshape(B, L, HL), vrep,
                      preferred_element_type=f32).reshape(N, D_MODEL)  # (32, 32)
    attn = o_un / denom                                              # exact softmax normalization

    # --- output projection + residual + norm1 ---
    new_x = jnp.dot(attn, wo, preferred_element_type=f32) + bo
    x1 = _layernorm(x + new_x, g1, be1)

    # --- FFN: conv1(1x1) -> relu -> conv2(1x1), residual, norm2 ---
    y = jnp.maximum(jnp.dot(x1, w1, preferred_element_type=f32) + b1, 0.0)   # (32, 128)
    y = jnp.dot(y, w2, preferred_element_type=f32) + b2                      # (32, 32)
    # Note: at N*D = 32x32 the output store is 4 masked vst; if B*L is ever
    # scaled up, present the output as a lane-dense (N*D/128, 128) slab instead.
    out_ref[...] = _layernorm(x1 + y, g2, be2)


def pack_params(params):
    """Host-side packing: 16 tiny tensors + constant masks -> 2 DMA slabs."""
    (wq, bq, wk, bk, wv, bv, wo, bo, w1, b1, w2, b2, g1, be1, g2, be2) = params
    f32 = jnp.float32
    w_qkv = jnp.concatenate([wq, wk, wv, jnp.zeros((D_MODEL, D_MODEL), f32)], axis=1)  # (32,128)
    b_qkv = jnp.concatenate([bq, bk, bv, jnp.zeros((1, D_MODEL), f32)], axis=1)        # (1,128)
    wide = jnp.concatenate(
        [w_qkv, w1, jnp.asarray(HMASK_T_NP), b_qkv, b1], axis=0)                       # (98,128)
    narrow = jnp.concatenate(
        [wo, w2, jnp.asarray(HMASK_NP), bo, b2, g1, be1, g2, be2], axis=0)             # (294,32)
    return wide, narrow


_COST = pl.CostEstimate(flops=1_700_000, transcendentals=4200, bytes_accessed=96_000)
_VMEM = pltpu.MemorySpace.VMEM


@jax.jit
def encoder_layer_forward(x, params):
    wide, narrow = pack_params(params)
    x2 = x.reshape(N, D_MODEL)                       # wrapper-side flatten (free)
    out2 = pl.pallas_call(
        encoder_layer_kernel,
        out_shape=jax.ShapeDtypeStruct((N, D_MODEL), jnp.float32),
        in_specs=[pl.BlockSpec(memory_space=_VMEM)] * 3,
        out_specs=pl.BlockSpec(memory_space=_VMEM),
        cost_estimate=_COST,
    )(x2, wide, narrow)                              # single invocation, 3 input DMAs
    return out2.reshape(B, L, D_MODEL)


def reference_forward(x, params):
    """Pure-JAX reference of the same semantics (eval-mode dropout)."""
    (wq, bq, wk, bk, wv, bv, wo, bo, w1, b1, w2, b2, g1, be1, g2, be2) = params
    q = x @ wq + bq
    k = x @ wk + bk
    v = x @ wv + bv
    q = q.reshape(B, L, N_HEADS, D_HEAD).transpose(0, 2, 1, 3)
    k = k.reshape(B, L, N_HEADS, D_HEAD).transpose(0, 2, 1, 3)
    v = v.reshape(B, L, N_HEADS, D_HEAD).transpose(0, 2, 1, 3)
    s = jnp.einsum("bhqd,bhkd->bhqk", q, k) / math.sqrt(D_HEAD)
    p = jax.nn.softmax(s, axis=-1)
    o = jnp.einsum("bhqk,bhkd->bhqd", p, v)
    o = o.transpose(0, 2, 1, 3).reshape(B, L, D_MODEL)
    new_x = o @ wo + bo
    x1 = _layernorm(x + new_x, g1, be1)
    y = jnp.maximum(x1 @ w1 + b1, 0.0)
    y = y @ w2 + b2
    return _layernorm(x1 + y, g2, be2)


def make_params(key):
    """Deterministic synthetic parameters (PyTorch weights pre-transposed to (in, out))."""
    ks = jax.random.split(key, 12)
    f32 = jnp.float32
    wq = 0.05 * jax.random.normal(ks[0], (D_MODEL, D_MODEL), f32)
    bq = 0.01 * jax.random.normal(ks[1], (1, D_MODEL), f32)
    wk = 0.05 * jax.random.normal(ks[2], (D_MODEL, D_MODEL), f32)
    bk = 0.01 * jax.random.normal(ks[3], (1, D_MODEL), f32)
    wv = 0.05 * jax.random.normal(ks[4], (D_MODEL, D_MODEL), f32)
    bv = 0.01 * jax.random.normal(ks[5], (1, D_MODEL), f32)
    wo = 0.05 * jax.random.normal(ks[6], (D_MODEL, D_MODEL), f32)
    bo = 0.01 * jax.random.normal(ks[7], (1, D_MODEL), f32)
    # conv1: PyTorch weight (d_ff, d_model, 1) -> squeeze -> transpose -> (d_model, d_ff)
    w1 = 0.05 * jax.random.normal(ks[8], (D_MODEL, D_FF), f32)
    b1 = 0.01 * jax.random.normal(ks[9], (1, D_FF), f32)
    # conv2: (d_model, d_ff, 1) -> (d_ff, d_model)
    w2 = 0.05 * jax.random.normal(ks[10], (D_FF, D_MODEL), f32)
    b2 = 0.01 * jax.random.normal(ks[11], (1, D_MODEL), f32)
    g1 = jnp.ones((1, D_MODEL), f32)
    be1 = jnp.zeros((1, D_MODEL), f32)
    g2 = jnp.ones((1, D_MODEL), f32)
    be2 = jnp.zeros((1, D_MODEL), f32)
    return (wq, bq, wk, bk, wv, bv, wo, bo, w1, b1, w2, b2, g1, be1, g2, be2)


if __name__ == "__main__":
    key = jax.random.PRNGKey(0)
    kx, kp = jax.random.split(key)
    x = jax.random.normal(kx, (B, L, D_MODEL), jnp.float32)
    params = make_params(kp)

    out = encoder_layer_forward(x, params)
    out = jax.block_until_ready(out)

    ref = reference_forward(x, params)
    assert out.shape == (B, L, D_MODEL)
    assert bool(jnp.allclose(out, ref, atol=2e-4, rtol=2e-4)), "mismatch vs reference"
    print("KERNEL_OK")
</pallas_src>

<mosaic_0001>
module attributes {stable_mosaic.version = 11 : i64} {
  func.func @encoder_layer_kernel(%arg0: memref<32x32xf32, #tpu.memory_space<vmem>>, %arg1: memref<98x128xf32, #tpu.memory_space<vmem>>, %arg2: memref<294x32xf32, #tpu.memory_space<vmem>>, %arg3: memref<32x32xf32, #tpu.memory_space<vmem>>) attributes {dimension_semantics = [], scalar_prefetch = 0 : i64, scratch_operands = 0 : i64, tpu.core_type = #tpu.core_type<tc>} {
    %c0 = arith.constant 0 : index
    %c0_0 = arith.constant 0 : index
    %0 = vector.load %arg0[%c0, %c0_0] : memref<32x32xf32, #tpu.memory_space<vmem>>, vector<32x32xf32>
    %c0_1 = arith.constant 0 : index
    %c0_2 = arith.constant 0 : index
    %1 = vector.load %arg1[%c0_1, %c0_2] : memref<98x128xf32, #tpu.memory_space<vmem>>, vector<32x128xf32>
    %c32 = arith.constant 32 : index
    %c0_3 = arith.constant 0 : index
    %2 = vector.load %arg1[%c32, %c0_3] : memref<98x128xf32, #tpu.memory_space<vmem>>, vector<32x128xf32>
    %c64 = arith.constant 64 : index
    %c0_4 = arith.constant 0 : index
    %3 = vector.load %arg1[%c64, %c0_4] : memref<98x128xf32, #tpu.memory_space<vmem>>, vector<32x128xf32>
    %c96 = arith.constant 96 : index
    %c0_5 = arith.constant 0 : index
    %4 = vector.load %arg1[%c96, %c0_5] : memref<98x128xf32, #tpu.memory_space<vmem>>, vector<1x128xf32>
    %c97 = arith.constant 97 : index
    %c0_6 = arith.constant 0 : index
    %5 = vector.load %arg1[%c97, %c0_6] : memref<98x128xf32, #tpu.memory_space<vmem>>, vector<1x128xf32>
    %c0_7 = arith.constant 0 : index
    %c0_8 = arith.constant 0 : index
    %6 = vector.load %arg2[%c0_7, %c0_8] : memref<294x32xf32, #tpu.memory_space<vmem>>, vector<32x32xf32>
    %c32_9 = arith.constant 32 : index
    %c0_10 = arith.constant 0 : index
    %7 = vector.load %arg2[%c32_9, %c0_10] : memref<294x32xf32, #tpu.memory_space<vmem>>, vector<128x32xf32>
    %c160 = arith.constant 160 : index
    %c0_11 = arith.constant 0 : index
    %8 = vector.load %arg2[%c160, %c0_11] : memref<294x32xf32, #tpu.memory_space<vmem>>, vector<128x32xf32>
    %c288 = arith.constant 288 : index
    %c0_12 = arith.constant 0 : index
    %9 = vector.load %arg2[%c288, %c0_12] : memref<294x32xf32, #tpu.memory_space<vmem>>, vector<1x32xf32>
    %c289 = arith.constant 289 : index
    %c0_13 = arith.constant 0 : index
    %10 = vector.load %arg2[%c289, %c0_13] : memref<294x32xf32, #tpu.memory_space<vmem>>, vector<1x32xf32>
    %c290 = arith.constant 290 : index
    %c0_14 = arith.constant 0 : index
    %11 = vector.load %arg2[%c290, %c0_14] : memref<294x32xf32, #tpu.memory_space<vmem>>, vector<1x32xf32>
    %c291 = arith.constant 291 : index
    %c0_15 = arith.constant 0 : index
    %12 = vector.load %arg2[%c291, %c0_15] : memref<294x32xf32, #tpu.memory_space<vmem>>, vector<1x32xf32>
    %c292 = arith.constant 292 : index
    %c0_16 = arith.constant 0 : index
    %13 = vector.load %arg2[%c292, %c0_16] : memref<294x32xf32, #tpu.memory_space<vmem>>, vector<1x32xf32>
    %c293 = arith.constant 293 : index
    %c0_17 = arith.constant 0 : index
    %14 = vector.load %arg2[%c293, %c0_17] : memref<294x32xf32, #tpu.memory_space<vmem>>, vector<1x32xf32>
    %cst = arith.constant dense<0.000000e+00> : vector<32x128xf32>
    %15 = tpu.matmul %0, %1, %cst {dimension_numbers = #tpu.dot_dimension_numbers<[1], [0], [0], [1], [0, 0, 1, 1], [], []>} : vector<32x32xf32>, vector<32x128xf32>, vector<32x128xf32> -> vector<32x128xf32>
    %16 = vector.broadcast %4 : vector<1x128xf32> to vector<32x128xf32>
    %17 = arith.addf %15, %16 : vector<32x128xf32>
    %18 = vector.extract_strided_slice %17 {offsets = [0, 0], sizes = [32, 32], strides = [1, 1]} : vector<32x128xf32> to vector<32x32xf32>
    %cst_18 = arith.constant 5.000000e-01 : f32
    %19 = vector.broadcast %cst_18 : f32 to vector<32x32xf32>
    %20 = arith.mulf %18, %19 : vector<32x32xf32>
    %21 = vector.extract_strided_slice %17 {offsets = [0, 32], sizes = [32, 32], strides = [1, 1]} : vector<32x128xf32> to vector<32x32xf32>
    %22 = vector.extract_strided_slice %17 {offsets = [0, 64], sizes = [32, 32], strides = [1, 1]} : vector<32x128xf32> to vector<32x32xf32>
    %23 = vector.shape_cast %20 : vector<32x32xf32> to vector<2x16x32xf32>
    %24 = vector.shape_cast %21 : vector<32x32xf32> to vector<2x16x32xf32>
    %25 = tpu.transpose %24, [0, 2, 1] : vector<2x16x32xf32> -> vector<2x32x16xf32>
    %26 = tpu.concatenate %25, %25, %25, %25, %25, %25, %25, %25 in 2 : vector<2x32x16xf32>, vector<2x32x16xf32>, vector<2x32x16xf32>, vector<2x32x16xf32>, vector<2x32x16xf32>, vector<2x32x16xf32>, vector<2x32x16xf32>, vector<2x32x16xf32> -> vector<2x32x128xf32>
    %27 = vector.shape_cast %3 : vector<32x128xf32> to vector<1x32x128xf32>
    %28 = vector.broadcast %27 : vector<1x32x128xf32> to vector<2x32x128xf32>
    %29 = arith.mulf %26, %28 : vector<2x32x128xf32>
    %30 = vector.shape_cast %22 : vector<32x32xf32> to vector<2x16x32xf32>
    %31 = tpu.concatenate %30, %30, %30, %30, %30, %30, %30, %30 in 1 : vector<2x16x32xf32>, vector<2x16x32xf32>, vector<2x16x32xf32>, vector<2x16x32xf32>, vector<2x16x32xf32>, vector<2x16x32xf32>, vector<2x16x32xf32>, vector<2x16x32xf32> -> vector<2x128x32xf32>
    %32 = vector.shape_cast %8 : vector<128x32xf32> to vector<1x128x32xf32>
    %33 = vector.broadcast %32 : vector<1x128x32xf32> to vector<2x128x32xf32>
    %34 = arith.mulf %31, %33 : vector<2x128x32xf32>
    "tpu.trace_start"() <{level = 10 : i32, message = "bld,bdr->blr"}> : () -> ()
    %cst_19 = arith.constant dense<0.000000e+00> : vector<2x16x128xf32>
    %35 = tpu.matmul %23, %29, %cst_19 {dimension_numbers = #tpu.dot_dimension_numbers<[2], [1], [1], [2], [0, 0, 0, 1, 1, 2], [0], [0]>} : vector<2x16x32xf32>, vector<2x32x128xf32>, vector<2x16x128xf32> -> vector<2x16x128xf32>
    "tpu.trace_stop"() : () -> ()
    %36 = vector.shape_cast %35 : vector<2x16x128xf32> to vector<32x128xf32>
    %cst_20 = arith.constant dense<0xFF800000> : vector<32xf32>
    %37 = vector.multi_reduction <maximumf>, %36, %cst_20 [1] : vector<32x128xf32> to vector<32xf32>
    %38 = vector.shape_cast %37 : vector<32xf32> to vector<32x1xf32>
    %39 = vector.broadcast %38 : vector<32x1xf32> to vector<32x128xf32>
    %40 = arith.subf %36, %39 : vector<32x128xf32>
    %41 = math.exp %40 : vector<32x128xf32>
    %cst_21 = arith.constant dense<0.000000e+00> : vector<32x32xf32>
    %42 = tpu.matmul %41, %8, %cst_21 {dimension_numbers = #tpu.dot_dimension_numbers<[1], [0], [0], [1], [0, 0, 1, 1], [], []>} : vector<32x128xf32>, vector<128x32xf32>, vector<32x32xf32> -> vector<32x32xf32>
    %43 = vector.shape_cast %41 : vector<32x128xf32> to vector<2x16x128xf32>
    "tpu.trace_start"() <{level = 10 : i32, message = "blr,brd->bld"}> : () -> ()
    %cst_22 = arith.constant dense<0.000000e+00> : vector<2x16x32xf32>
    %44 = tpu.matmul %43, %34, %cst_22 {dimension_numbers = #tpu.dot_dimension_numbers<[2], [1], [1], [2], [0, 0, 0, 1, 1, 2], [0], [0]>} : vector<2x16x128xf32>, vector<2x128x32xf32>, vector<2x16x32xf32> -> vector<2x16x32xf32>
    "tpu.trace_stop"() : () -> ()
    %45 = vector.shape_cast %44 : vector<2x16x32xf32> to vector<32x32xf32>
    %46 = arith.divf %45, %42 : vector<32x32xf32>
    %cst_23 = arith.constant dense<0.000000e+00> : vector<32x32xf32>
    %47 = tpu.matmul %46, %6, %cst_23 {dimension_numbers = #tpu.dot_dimension_numbers<[1], [0], [0], [1], [0, 0, 1, 1], [], []>} : vector<32x32xf32>, vector<32x32xf32>, vector<32x32xf32> -> vector<32x32xf32>
    %48 = vector.broadcast %9 : vector<1x32xf32> to vector<32x32xf32>
    %49 = arith.addf %47, %48 : vector<32x32xf32>
    %50 = arith.addf %0, %49 : vector<32x32xf32>
    %cst_24 = arith.constant dense<0.000000e+00> : vector<32xf32>
    %51 = vector.multi_reduction <add>, %50, %cst_24 [1] : vector<32x32xf32> to vector<32xf32>
    %52 = vector.shape_cast %51 : vector<32xf32> to vector<32x1xf32>
    %cst_25 = arith.constant 3.200000e+01 : f32
    %53 = vector.broadcast %cst_25 : f32 to vector<32x1xf32>
    %54 = arith.divf %52, %53 : vector<32x1xf32>
    %55 = vector.broadcast %54 : vector<32x1xf32> to vector<32x32xf32>
    %56 = arith.subf %50, %55 : vector<32x32xf32>
    %57 = arith.mulf %56, %56 : vector<32x32xf32>
    %cst_26 = arith.constant dense<0.000000e+00> : vector<32xf32>
    %58 = vector.multi_reduction <add>, %57, %cst_26 [1] : vector<32x32xf32> to vector<32xf32>
    %59 = vector.shape_cast %58 : vector<32xf32> to vector<32x1xf32>
    %cst_27 = arith.constant 3.200000e+01 : f32
    %60 = vector.broadcast %cst_27 : f32 to vector<32x1xf32>
    %61 = arith.divf %59, %60 : vector<32x1xf32>
    %62 = vector.broadcast %54 : vector<32x1xf32> to vector<32x32xf32>
    %63 = arith.subf %50, %62 : vector<32x32xf32>
    %cst_28 = arith.constant 9.99999974E-6 : f32
    %64 = vector.broadcast %cst_28 : f32 to vector<32x1xf32>
    %65 = arith.addf %61, %64 : vector<32x1xf32>
    %66 = math.rsqrt %65 : vector<32x1xf32>
    %67 = vector.broadcast %66 : vector<32x1xf32> to vector<32x32xf32>
    %68 = arith.mulf %63, %67 : vector<32x32xf32>
    %69 = vector.broadcast %11 : vector<1x32xf32> to vector<32x32xf32>
    %70 = arith.mulf %68, %69 : vector<32x32xf32>
    %71 = vector.broadcast %12 : vector<1x32xf32> to vector<32x32xf32>
    %72 = arith.addf %70, %71 : vector<32x32xf32>
    %cst_29 = arith.constant dense<0.000000e+00> : vector<32x128xf32>
    %73 = tpu.matmul %72, %2, %cst_29 {dimension_numbers = #tpu.dot_dimension_numbers<[1], [0], [0], [1], [0, 0, 1, 1], [], []>} : vector<32x32xf32>, vector<32x128xf32>, vector<32x128xf32> -> vector<32x128xf32>
    %74 = vector.broadcast %5 : vector<1x128xf32> to vector<32x128xf32>
    %75 = arith.addf %73, %74 : vector<32x128xf32>
    %cst_30 = arith.constant 0.000000e+00 : f32
    %76 = vector.broadcast %cst_30 : f32 to vector<32x128xf32>
    %77 = arith.maximumf %75, %76 : vector<32x128xf32>
    %cst_31 = arith.constant dense<0.000000e+00> : vector<32x32xf32>
    %78 = tpu.matmul %77, %7, %cst_31 {dimension_numbers = #tpu.dot_dimension_numbers<[1], [0], [0], [1], [0, 0, 1, 1], [], []>} : vector<32x128xf32>, vector<128x32xf32>, vector<32x32xf32> -> vector<32x32xf32>
    %79 = vector.broadcast %10 : vector<1x32xf32> to vector<32x32xf32>
    %80 = arith.addf %78, %79 : vector<32x32xf32>
    %81 = arith.addf %72, %80 : vector<32x32xf32>
    %cst_32 = arith.constant dense<0.000000e+00> : vector<32xf32>
    %82 = vector.multi_reduction <add>, %81, %cst_32 [1] : vector<32x32xf32> to vector<32xf32>
    %83 = vector.shape_cast %82 : vector<32xf32> to vector<32x1xf32>
    %cst_33 = arith.constant 3.200000e+01 : f32
    %84 = vector.broadcast %cst_33 : f32 to vector<32x1xf32>
    %85 = arith.divf %83, %84 : vector<32x1xf32>
    %86 = vector.broadcast %85 : vector<32x1xf32> to vector<32x32xf32>
    %87 = arith.subf %81, %86 : vector<32x32xf32>
    %88 = arith.mulf %87, %87 : vector<32x32xf32>
    %cst_34 = arith.constant dense<0.000000e+00> : vector<32xf32>
    %89 = vector.multi_reduction <add>, %88, %cst_34 [1] : vector<32x32xf32> to vector<32xf32>
    %90 = vector.shape_cast %89 : vector<32xf32> to vector<32x1xf32>
    %cst_35 = arith.constant 3.200000e+01 : f32
    %91 = vector.broadcast %cst_35 : f32 to vector<32x1xf32>
    %92 = arith.divf %90, %91 : vector<32x1xf32>
    %93 = vector.broadcast %85 : vector<32x1xf32> to vector<32x32xf32>
    %94 = arith.subf %81, %93 : vector<32x32xf32>
    %cst_36 = arith.constant 9.99999974E-6 : f32
    %95 = vector.broadcast %cst_36 : f32 to vector<32x1xf32>
    %96 = arith.addf %92, %95 : vector<32x1xf32>
    %97 = math.rsqrt %96 : vector<32x1xf32>
    %98 = vector.broadcast %97 : vector<32x1xf32> to vector<32x32xf32>
    %99 = arith.mulf %94, %98 : vector<32x32xf32>
    %100 = vector.broadcast %13 : vector<1x32xf32> to vector<32x32xf32>
    %101 = arith.mulf %99, %100 : vector<32x32xf32>
    %102 = vector.broadcast %14 : vector<1x32xf32> to vector<32x32xf32>
    %103 = arith.addf %101, %102 : vector<32x32xf32>
    %c0_37 = arith.constant 0 : index
    %c0_38 = arith.constant 0 : index
    %104 = vector.load %arg3[%c0_37, %c0_38] : memref<32x32xf32, #tpu.memory_space<vmem>>, vector<32x32xf32>
    tpu.vector_store %arg3[%c0_37, %c0_38], %103 {strides = array<i32>} : memref<32x32xf32, #tpu.memory_space<vmem>>, vector<32x32xf32>,
    return
  }
}

</mosaic_0001>

<llo_original>
// kernel: encoder_layer_forward.1
$region0: #{encoder_layer_forward.1}
  #allocation0 [shape = 'u32[]', space=smem, size = 0x4, offset = 0x4, fixed_abs, tag = 'smem constant byte address 0x4 - core index']
  #allocation1 [shape = 'u32[144,128]{1,0:T(1,128)}', space=vmem, size = 0x12000, scoped, tag = 'internal scratch']
  %s0 = inlined_call_operand.vmem [shape: f32[32,32], index: 0, kind: input, shape index: {}]
  %s1 = inlined_call_operand.vmem [shape: f32[98,128], index: 1, kind: input, shape index: {}]
  %s2 = inlined_call_operand.vmem [shape: f32[294,32], index: 2, kind: input, shape index: {}]
  %s3 = inlined_call_operand.hbm [shape: f32[32,32], index: 3, kind: output, shape index: {}]
  %s4 = sld [smem:[#allocation0]]
  $region22: #{encoder_layer_forward.1} parent=0
    _
  %s6 = ssub.s32 1, %s4
  %s7 = scalar_select 0, %s6, %s4
  $region1: #{encoder_layer_forward.1} parent=0
    #allocation2 [shape = 'u8[16384]{0}', space=vmem, size = 0x4000, scoped, tag = 'output window, operand 0, single buffered']
    #allocation3 [shape = 's32[1]{0}', space=sflag, size = 0x4, scoped, tag = 'scoped memory for encoder_layer_forward.1']
    %8 = vsyncpa [#allocation3], 0
    // Predicated region
    $region2: #{encoder_layer_forward.1} parent=1 // pred_check
      _
    $region3: #{encoder_layer_forward.1} parent=1 // pred_check_branch
      %10 = sbr.rel (0) target = $region5
    $region4: #{encoder_layer_forward.1} parent=1 // pred_region
      _
    $region5: #{encoder_layer_forward.1} parent=1 // pred_fallthru
      _
    // Predicated region
    $region6: #{encoder_layer_forward.1} parent=1 // pred_check
      _
    $region7: #{encoder_layer_forward.1} parent=1 // pred_check_branch
      %12 = sbr.rel (0) target = $region9
    $region8: #{encoder_layer_forward.1} parent=1 // pred_region
      _
    $region9: #{encoder_layer_forward.1} parent=1 // pred_fallthru
      _
    // Predicated region
    $region10: #{encoder_layer_forward.1} parent=1 // pred_check
      _
    $region11: #{encoder_layer_forward.1} parent=1 // pred_check_branch
      %14 = sbr.rel (0) target = $region13
    $region12: #{encoder_layer_forward.1} parent=1 // pred_region
      _
    $region13: #{encoder_layer_forward.1} parent=1 // pred_fallthru
      _
    %v15 = vld [vmem:[%s0] sm:$0xff]
    %v16 = vld [vmem:[%s0 + $0x8] sm:$0xff]
    %v17 = vld [vmem:[%s0 + $0x10] sm:$0xff]
    %v18 = vld [vmem:[%s0 + $0x18] sm:$0xff]
    %v19 = vld [vmem:[%s1] sm:$0xff]
    %v20 = vld [vmem:[%s1 + $0x8] sm:$0xff]
    %v21 = vld [vmem:[%s1 + $0x10] sm:$0xff]
    %v22 = vld [vmem:[%s1 + $0x18] sm:$0xff]
    %v23 = vld [vmem:[%s1 + $0x20] sm:$0xff]
    %v24 = vld [vmem:[%s1 + $0x28] sm:$0xff]
    %v25 = vld [vmem:[%s1 + $0x30] sm:$0xff]
    %v26 = vld [vmem:[%s1 + $0x38] sm:$0xff]
    %v27 = vld [vmem:[%s1 + $0x40] sm:$0xff]
    %v28 = vld [vmem:[%s1 + $0x48] sm:$0xff]
    %v29 = vld [vmem:[%s1 + $0x50] sm:$0xff]
    %v30 = vld [vmem:[%s1 + $0x58] sm:$0xff]
    %v31 = vld [vmem:[%s1 + $0x60] sm:$0x1]
    %v32 = vld [vmem:[%s1 + $0x61] sm:$0x1]
    %v33 = vld [vmem:[%s2] sm:$0xff]
    %v34 = vld [vmem:[%s2 + $0x8] sm:$0xff]
    %v35 = vld [vmem:[%s2 + $0x10] sm:$0xff]
    %v36 = vld [vmem:[%s2 + $0x18] sm:$0xff]
    %v37 = vld [vmem:[%s2 + $0x20] sm:$0xff]
    %v38 = vld [vmem:[%s2 + $0x28] sm:$0xff]
    %v39 = vld [vmem:[%s2 + $0x30] sm:$0xff]
    %v40 = vld [vmem:[%s2 + $0x38] sm:$0xff]
    %v41 = vld [vmem:[%s2 + $0x40] sm:$0xff]
    %v42 = vld [vmem:[%s2 + $0x48] sm:$0xff]
    %v43 = vld [vmem:[%s2 + $0x50] sm:$0xff]
    %v44 = vld [vmem:[%s2 + $0x58] sm:$0xff]
    %v45 = vld [vmem:[%s2 + $0x60] sm:$0xff]
    %v46 = vld [vmem:[%s2 + $0x68] sm:$0xff]
    %v47 = vld [vmem:[%s2 + $0x70] sm:$0xff]
    %v48 = vld [vmem:[%s2 + $0x78] sm:$0xff]
    %v49 = vld [vmem:[%s2 + $0x80] sm:$0xff]
    %v50 = vld [vmem:[%s2 + $0x88] sm:$0xff]
    %v51 = vld [vmem:[%s2 + $0x90] sm:$0xff]
    %v52 = vld [vmem:[%s2 + $0x98] sm:$0xff]
    %v53 = vld [vmem:[%s2 + $0xa0] sm:$0xff]
    %v54 = vld [vmem:[%s2 + $0xa8] sm:$0xff]
    %v55 = vld [vmem:[%s2 + $0xb0] sm:$0xff]
    %v56 = vld [vmem:[%s2 + $0xb8] sm:$0xff]
    %v57 = vld [vmem:[%s2 + $0xc0] sm:$0xff]
    %v58 = vld [vmem:[%s2 + $0xc8] sm:$0xff]
    %v59 = vld [vmem:[%s2 + $0xd0] sm:$0xff]
    %v60 = vld [vmem:[%s2 + $0xd8] sm:$0xff]
    %v61 = vld [vmem:[%s2 + $0xe0] sm:$0xff]
    %v62 = vld [vmem:[%s2 + $0xe8] sm:$0xff]
    %v63 = vld [vmem:[%s2 + $0xf0] sm:$0xff]
    %v64 = vld [vmem:[%s2 + $0xf8] sm:$0xff]
    %v65 = vld [vmem:[%s2 + $0x100] sm:$0xff]
    %v66 = vld [vmem:[%s2 + $0x108] sm:$0xff]
    %v67 = vld [vmem:[%s2 + $0x110] sm:$0xff]
    %v68 = vld [vmem:[%s2 + $0x118] sm:$0xff]
    %v69 = vld [vmem:[%s2 + $0x120] sm:$0x1]
    %v70 = vld [vmem:[%s2 + $0x121] sm:$0x1]
    %v71 = vld [vmem:[%s2 + $0x122] sm:$0x1]
    %v72 = vld [vmem:[%s2 + $0x123] sm:$0x1]
    %v73 = vld [vmem:[%s2 + $0x124] sm:$0x1]
    %v74 = vld [vmem:[%s2 + $0x125] sm:$0x1]
    %v75 = vlaneseq
    %v76 = vshrl.u32 %v75, 7
    %v77 = vsub.s32 0, %v76
    %v78 = vrot.slane %v31, %v77
    %vm79 = vcmask 261120
    %v81 = vsel %vm79, %v15, 0
    %v84 = vsel %vm79, %v16, 0
    %v87 = vsel %vm79, %v17, 0
    %v90 = vsel %vm79, %v18, 0
    %92 = vmatprep.subr.mxu0 0.0
    %93 = vmatpush1.msra.mxu0 0.0
    %94 = vmatprep.subr.mxu0 0.0
    %95 = vmatpush1.msra.mxu0 0.0
    %96 = vmatprep.subr.mxu0 0.0
    %97 = vmatpush1.msra.mxu0 0.0
    %98 = vmatprep.subr.mxu0 0.0
    %99 = vmatpush1.msra.mxu0 0.0
    %100 = vmatprep.subr.mxu0 0.0
    %101 = vmatpush1.msra.mxu0 0.0
    %102 = vmatprep.subr.mxu0 0.0
    %103 = vmatpush1.msra.mxu0 0.0
    %104 = vmatprep.subr.mxu0 0.0
    %105 = vmatpush1.msra.mxu0 0.0
    %106 = vmatprep.subr.mxu0 0.0
    %107 = vmatpush1.msra.mxu0 0.0
    %108 = vmatprep.subr.mxu0 0.0
    %109 = vmatpush1.msra.mxu0 0.0
    %110 = vmatprep.subr.mxu0 0.0
    %111 = vmatpush1.msra.mxu0 0.0
    %112 = vmatprep.subr.mxu0 0.0
    %113 = vmatpush1.msra.mxu0 0.0
    %114 = vmatprep.subr.mxu0 0.0
    %115 = vmatpush1.msra.mxu0 0.0
    %116 = vmatprep.subr.mxu0 0.0
    %117 = vmatpush1.msra.mxu0 %v22
    %118 = vmatprep.subr.mxu0 0.0
    %119 = vmatpush1.msra.mxu0 %v21
    %120 = vmatprep.subr.mxu0 0.0
    %121 = vmatpush1.msra.mxu0 %v20
    %122 = vmatprep.subr.mxu0 0.0
    %123 = vmatpush1.msra.mxu0 %v19
    %124 = vmatprep.subr.mxu0 0.0
    %125 = vmatpush2.msra.mxu0 0.0
    %126 = vmatprep.subr.mxu0 0.0
    %127 = vmatpush2.msra.mxu0 0.0
    %128 = vmatprep.subr.mxu0 0.0
    %129 = vmatpush2.msra.mxu0 0.0
    %130 = vmatprep.subr.mxu0 0.0
    %131 = vmatpush2.msra.mxu0 0.0
    %132 = vmatprep.subr.mxu0 0.0
    %133 = vmatpush2.msra.mxu0 0.0
    %134 = vmatprep.subr.mxu0 0.0
    %135 = vmatpush2.msra.mxu0 0.0
    %136 = vmatprep.subr.mxu0 0.0
    %137 = vmatpush2.msra.mxu0 0.0
    %138 = vmatprep.subr.mxu0 0.0
    %139 = vmatpush2.msra.mxu0 0.0
    %140 = vmatprep.subr.mxu0 0.0
    %141 = vmatpush2.msra.mxu0 0.0
    %142 = vmatprep.subr.mxu0 0.0
    %143 = vmatpush2.msra.mxu0 0.0
    %144 = vmatprep.subr.mxu0 0.0
    %145 = vmatpush2.msra.mxu0 0.0
    %146 = vmatprep.subr.mxu0 0.0
    %147 = vmatpush2.msra.mxu0 0.0
    %148 = vmatprep.subr.mxu0 0.0
    %149 = vmatpush2.msra.mxu0 0.0
    %150 = vmatprep.subr.mxu0 0.0
    %151 = vmatpush2.msra.mxu0 0.0
    %152 = vmatprep.subr.mxu0 0.0
    %153 = vmatpush2.msra.mxu0 0.0
    %154 = vmatprep.subr.mxu0 0.0
    %155 = vmatpush2.msra.mxu0 0.0
    %156 = vmatprep.mubr.f32.mxu0 0.0
    %157 = vmatmul.mubr.f32.gmra.mxu0 %v81
    %v158 = vpop.f32.mrf.mxu0
    %v159 = vadd.f32 %v78, %v158
    %v160 = vpop.f32.mrf.mxu0
    %161 = vmatprep.mubr.f32.mxu0 0.0
    %162 = vmatmul.mubr.f32.gmra.mxu0 %v84
    %v163 = vpop.f32.mrf.mxu0
    %v164 = vadd.f32 %v78, %v163
    %v165 = vpop.f32.mrf.mxu0
    %166 = vmatprep.mubr.f32.mxu0 0.0
    %167 = vmatmul.mubr.f32.gmra.mxu0 %v87
    %v168 = vpop.f32.mrf.mxu0
    %v169 = vadd.f32 %v78, %v168
    %v170 = vpop.f32.mrf.mxu0
    %171 = vmatprep.mubr.f32.mxu0 0.0
    %172 = vmatmul.mubr.f32.gmra.mxu0 %v90
    %v173 = vpop.f32.mrf.mxu0
    %v174 = vadd.f32 %v78, %v173
    %v175 = vpop.f32.mrf.mxu0
    %176 = vdwg.mxu0
    %v177 = vmul.f32 %v159, 0.5
    %v178 = vmul.f32 %v164, 0.5
    %v179 = vmul.f32 %v169, 0.5
    %v180 = vmul.f32 %v174, 0.5
    %185 = vrot.lane.b32.xlu0 %v159, 96
    %v186 = vpop.permute.xlu0 %185
    %187 = vrot.lane.b32.xlu0 %v164, 96
    %v188 = vpop.permute.xlu0 %187
    %189 = vrot.lane.b32.xlu0 %v169, 96
    %v190 = vpop.permute.xlu0 %189
    %191 = vrot.lane.b32.xlu0 %v174, 96
    %v192 = vpop.permute.xlu0 %191
    %197 = vxpose.xlu0.b32.start [1/16] %v186, 128
    %198 = vxpose.xlu0.b32.cont [2/16] %v188, 128
    %199 = vxpose.xlu0.b32.cont [3/16] 0.0, 128
    %200 = vxpose.xlu0.b32.cont [4/16] 0.0, 128
    %201 = vxpose.xlu0.b32.cont [5/16] 0.0, 128
    %202 = vxpose.xlu0.b32.cont [6/16] 0.0, 128
    %203 = vxpose.xlu0.b32.cont [7/16] 0.0, 128
    %204 = vxpose.xlu0.b32.cont [8/16] 0.0, 128
    %205 = vxpose.xlu0.b32.cont [9/16] 0.0, 128
    %206 = vxpose.xlu0.b32.cont [10/16] 0.0, 128
    %207 = vxpose.xlu0.b32.cont [11/16] 0.0, 128
    %208 = vxpose.xlu0.b32.cont [12/16] 0.0, 128
    %209 = vxpose.xlu0.b32.cont [13/16] 0.0, 128
    %210 = vxpose.xlu0.b32.cont [14/16] 0.0, 128
    %211 = vxpose.xlu0.b32.cont [15/16] 0.0, 128
    %212 = vxpose.xlu0.b32.end [16/16] 0.0, 128
    %v213 = vpop.trf.xlu0
    %v214 = vpop.trf.xlu0
    %v215 = vpop.trf.xlu0
    %v216 = vpop.trf.xlu0
    %v217 = vpop.trf.xlu0
    %v218 = vpop.trf.xlu0
    %v219 = vpop.trf.xlu0
    %v220 = vpop.trf.xlu0
    %v221 = vpop.trf.xlu0
    %v222 = vpop.trf.xlu0
    %v223 = vpop.trf.xlu0
    %v224 = vpop.trf.xlu0
    %v225 = vpop.trf.xlu0
    %v226 = vpop.trf.xlu0
    %v227 = vpop.trf.xlu0
    %v228 = vpop.trf.xlu0
    %229 = vxpose.xlu0.b32.start [1/16] %v190, 128
    %230 = vxpose.xlu0.b32.cont [2/16] %v192, 128
    %231 = vxpose.xlu0.b32.cont [3/16] 0.0, 128
    %232 = vxpose.xlu0.b32.cont [4/16] 0.0, 128
    %233 = vxpose.xlu0.b32.cont [5/16] 0.0, 128
    %234 = vxpose.xlu0.b32.cont [6/16] 0.0, 128
    %235 = vxpose.xlu0.b32.cont [7/16] 0.0, 128
    %236 = vxpose.xlu0.b32.cont [8/16] 0.0, 128
    %237 = vxpose.xlu0.b32.cont [9/16] 0.0, 128
    %238 = vxpose.xlu0.b32.cont [10/16] 0.0, 128
    %239 = vxpose.xlu0.b32.cont [11/16] 0.0, 128
    %240 = vxpose.xlu0.b32.cont [12/16] 0.0, 128
    %241 = vxpose.xlu0.b32.cont [13/16] 0.0, 128
    %242 = vxpose.xlu0.b32.cont [14/16] 0.0, 128
    %243 = vxpose.xlu0.b32.cont [15/16] 0.0, 128
    %244 = vxpose.xlu0.b32.end [16/16] 0.0, 128
    %v245 = vpop.trf.xlu0
    %v246 = vpop.trf.xlu0
    %v247 = vpop.trf.xlu0
    %v248 = vpop.trf.xlu0
    %v249 = vpop.trf.xlu0
    %v250 = vpop.trf.xlu0
    %v251 = vpop.trf.xlu0
    %v252 = vpop.trf.xlu0
    %v253 = vpop.trf.xlu0
    %v254 = vpop.trf.xlu0
    %v255 = vpop.trf.xlu0
    %v256 = vpop.trf.xlu0
    %v257 = vpop.trf.xlu0
    %v258 = vpop.trf.xlu0
    %v259 = vpop.trf.xlu0
    %v260 = vpop.trf.xlu0
    %269 = vrot.lane.b32.xlu0 %v213, 16
    %v270 = vpop.permute.xlu0 %269
    %271 = vrot.lane.b32.xlu0 %v214, 16
    %v272 = vpop.permute.xlu0 %271
    %273 = vrot.lane.b32.xlu0 %v215, 16
    %v274 = vpop.permute.xlu0 %273
    %275 = vrot.lane.b32.xlu0 %v216, 16
    %v276 = vpop.permute.xlu0 %275
    %277 = vrot.lane.b32.xlu0 %v245, 16
    %v278 = vpop.permute.xlu0 %277
    %279 = vrot.lane.b32.xlu0 %v246, 16
    %v280 = vpop.permute.xlu0 %279
    %281 = vrot.lane.b32.xlu0 %v247, 16
    %v282 = vpop.permute.xlu0 %281
    %283 = vrot.lane.b32.xlu0 %v248, 16
    %v284 = vpop.permute.xlu0 %283
    %293 = vrot.lane.b32.xlu0 %v213, 32
    %v294 = vpop.permute.xlu0 %293
    %295 = vrot.lane.b32.xlu0 %v214, 32
    %v296 = vpop.permute.xlu0 %295
    %297 = vrot.lane.b32.xlu0 %v215, 32
    %v298 = vpop.permute.xlu0 %297
    %299 = vrot.lane.b32.xlu0 %v216, 32
    %v300 = vpop.permute.xlu0 %299
    %301 = vrot.lane.b32.xlu0 %v245, 32
    %v302 = vpop.permute.xlu0 %301
    %303 = vrot.lane.b32.xlu0 %v246, 32
    %v304 = vpop.permute.xlu0 %303
    %305 = vrot.lane.b32.xlu0 %v247, 32
    %v306 = vpop.permute.xlu0 %305
    %307 = vrot.lane.b32.xlu0 %v248, 32
    %v308 = vpop.permute.xlu0 %307
    %317 = vrot.lane.b32.xlu0 %v213, 48
    %v318 = vpop.permute.xlu0 %317
    %319 = vrot.lane.b32.xlu0 %v214, 48
    %v320 = vpop.permute.xlu0 %319
    %321 = vrot.lane.b32.xlu0 %v215, 48
    %v322 = vpop.permute.xlu0 %321
    %323 = vrot.lane.b32.xlu0 %v216, 48
    %v324 = vpop.permute.xlu0 %323
    %325 = vrot.lane.b32.xlu0 %v245, 48
    %v326 = vpop.permute.xlu0 %325
    %327 = vrot.lane.b32.xlu0 %v246, 48
    %v328 = vpop.permute.xlu0 %327
    %329 = vrot.lane.b32.xlu0 %v247, 48
    %v330 = vpop.permute.xlu0 %329
    %331 = vrot.lane.b32.xlu0 %v248, 48
    %v332 = vpop.permute.xlu0 %331
    %341 = vrot.lane.b32.xlu0 %v213, 64
    %v342 = vpop.permute.xlu0 %341
    %343 = vrot.lane.b32.xlu0 %v214, 64
    %v344 = vpop.permute.xlu0 %343
    %345 = vrot.lane.b32.xlu0 %v215, 64
    %v346 = vpop.permute.xlu0 %345
    %347 = vrot.lane.b32.xlu0 %v216, 64
    %v348 = vpop.permute.xlu0 %347
    %349 = vrot.lane.b32.xlu0 %v245, 64
    %v350 = vpop.permute.xlu0 %349
    %351 = vrot.lane.b32.xlu0 %v246, 64
    %v352 = vpop.permute.xlu0 %351
    %353 = vrot.lane.b32.xlu0 %v247, 64
    %v354 = vpop.permute.xlu0 %353
    %355 = vrot.lane.b32.xlu0 %v248, 64
    %v356 = vpop.permute.xlu0 %355
    %365 = vrot.lane.b32.xlu0 %v213, 80
    %v366 = vpop.permute.xlu0 %365
    %367 = vrot.lane.b32.xlu0 %v214, 80
    %v368 = vpop.permute.xlu0 %367
    %369 = vrot.lane.b32.xlu0 %v215, 80
    %v370 = vpop.permute.xlu0 %369
    %371 = vrot.lane.b32.xlu0 %v216, 80
    %v372 = vpop.permute.xlu0 %371
    %373 = vrot.lane.b32.xlu0 %v245, 80
    %v374 = vpop.permute.xlu0 %373
    %375 = vrot.lane.b32.xlu0 %v246, 80
    %v376 = vpop.permute.xlu0 %375
    %377 = vrot.lane.b32.xlu0 %v247, 80
    %v378 = vpop.permute.xlu0 %377
    %379 = vrot.lane.b32.xlu0 %v248, 80
    %v380 = vpop.permute.xlu0 %379
    %389 = vrot.lane.b32.xlu0 %v213, 96
    %v390 = vpop.permute.xlu0 %389
    %391 = vrot.lane.b32.xlu0 %v214, 96
    %v392 = vpop.permute.xlu0 %391
    %393 = vrot.lane.b32.xlu0 %v215, 96
    %v394 = vpop.permute.xlu0 %393
    %395 = vrot.lane.b32.xlu0 %v216, 96
    %v396 = vpop.permute.xlu0 %395
    %397 = vrot.lane.b32.xlu0 %v245, 96
    %v398 = vpop.permute.xlu0 %397
    %399 = vrot.lane.b32.xlu0 %v246, 96
    %v400 = vpop.permute.xlu0 %399
    %401 = vrot.lane.b32.xlu0 %v247, 96
    %v402 = vpop.permute.xlu0 %401
    %403 = vrot.lane.b32.xlu0 %v248, 96
    %v404 = vpop.permute.xlu0 %403
    %413 = vrot.lane.b32.xlu0 %v213, 112
    %v414 = vpop.permute.xlu0 %413
    %415 = vrot.lane.b32.xlu0 %v214, 112
    %v416 = vpop.permute.xlu0 %415
    %417 = vrot.lane.b32.xlu0 %v215, 112
    %v418 = vpop.permute.xlu0 %417
    %419 = vrot.lane.b32.xlu0 %v216, 112
    %v420 = vpop.permute.xlu0 %419
    %421 = vrot.lane.b32.xlu0 %v245, 112
    %v422 = vpop.permute.xlu0 %421
    %423 = vrot.lane.b32.xlu0 %v246, 112
    %v424 = vpop.permute.xlu0 %423
    %425 = vrot.lane.b32.xlu0 %v247, 112
    %v426 = vpop.permute.xlu0 %425
    %427 = vrot.lane.b32.xlu0 %v248, 112
    %v428 = vpop.permute.xlu0 %427
    %vm437 = vcmask 130048
    %v438 = vsel %vm437, %v213, %v270
    %v439 = vsel %vm437, %v214, %v272
    %v440 = vsel %vm437, %v215, %v274
    %v441 = vsel %vm437, %v216, %v276
    %v442 = vsel %vm437, %v245, %v278
    %v443 = vsel %vm437, %v246, %v280
    %v444 = vsel %vm437, %v247, %v282
    %v445 = vsel %vm437, %v248, %v284
    %v446 = vsel %vm79, %v438, %v294
    %v447 = vsel %vm79, %v439, %v296
    %v448 = vsel %vm79, %v440, %v298
    %v449 = vsel %vm79, %v441, %v300
    %v450 = vsel %vm79, %v442, %v302
    %v451 = vsel %vm79, %v443, %v304
    %v452 = vsel %vm79, %v444, %v306
    %v453 = vsel %vm79, %v445, %v308
    %vm454 = vcmask 392192
    %v455 = vsel %vm454, %v446, %v318
    %v456 = vsel %vm454, %v447, %v320
    %v457 = vsel %vm454, %v448, %v322
    %v458 = vsel %vm454, %v449, %v324
    %v459 = vsel %vm454, %v450, %v326
    %v460 = vsel %vm454, %v451, %v328
    %v461 = vsel %vm454, %v452, %v330
    %v462 = vsel %vm454, %v453, %v332
    %vm463 = vcmask 523264
    %v464 = vsel %vm463, %v455, %v342
    %v465 = vsel %vm463, %v456, %v344
    %v466 = vsel %vm463, %v457, %v346
    %v467 = vsel %vm463, %v458, %v348
    %v468 = vsel %vm463, %v459, %v350
    %v469 = vsel %vm463, %v460, %v352
    %v470 = vsel %vm463, %v461, %v354
    %v471 = vsel %vm463, %v462, %v356
    %vm472 = vcmask 654336
    %v473 = vsel %vm472, %v464, %v366
    %v474 = vsel %vm472, %v465, %v368
    %v475 = vsel %vm472, %v466, %v370
    %v476 = vsel %vm472, %v467, %v372
    %v477 = vsel %vm472, %v468, %v374
    %v478 = vsel %vm472, %v469, %v376
    %v479 = vsel %vm472, %v470, %v378
    %v480 = vsel %vm472, %v471, %v380
    %vm481 = vcmask 785408
    %v482 = vsel %vm481, %v473, %v390
    %v483 = vsel %vm481, %v474, %v392
    %v484 = vsel %vm481, %v475, %v394
    %v485 = vsel %vm481, %v476, %v396
    %v486 = vsel %vm481, %v477, %v398
    %v487 = vsel %vm481, %v478, %v400
    %v488 = vsel %vm481, %v479, %v402
    %v489 = vsel %vm481, %v480, %v404
    %vm490 = vcmask 916480
    %v491 = vsel %vm490, %v482, %v414
    %v492 = vsel %vm490, %v483, %v416
    %v493 = vsel %vm490, %v484, %v418
    %v494 = vsel %vm490, %v485, %v420
    %v495 = vsel %vm490, %v486, %v422
    %v496 = vsel %vm490, %v487, %v424
    %v497 = vsel %vm490, %v488, %v426
    %v498 = vsel %vm490, %v489, %v428
    %v499 = vmul.f32 %v491, %v27
    %v500 = vmul.f32 %v492, %v28
    %v501 = vmul.f32 %v493, %v29
    %v502 = vmul.f32 %v494, %v30
    %v503 = vmul.f32 %v495, %v27
    %v504 = vmul.f32 %v496, %v28
    %v505 = vmul.f32 %v497, %v29
    %v506 = vmul.f32 %v498, %v30
    %523 = vrot.lane.b32.xlu0 %v53, 64
    %v524 = vpop.permute.xlu0 %523
    %525 = vrot.lane.b32.xlu0 %v54, 64
    %v526 = vpop.permute.xlu0 %525
    %527 = vrot.lane.b32.xlu0 %v55, 64
    %v528 = vpop.permute.xlu0 %527
    %529 = vrot.lane.b32.xlu0 %v56, 64
    %v530 = vpop.permute.xlu0 %529
    %531 = vrot.lane.b32.xlu0 %v57, 64
    %v532 = vpop.permute.xlu0 %531
    %533 = vrot.lane.b32.xlu0 %v58, 64
    %v534 = vpop.permute.xlu0 %533
    %535 = vrot.lane.b32.xlu0 %v59, 64
    %v536 = vpop.permute.xlu0 %535
    %537 = vrot.lane.b32.xlu0 %v60, 64
    %v538 = vpop.permute.xlu0 %537
    %539 = vrot.lane.b32.xlu0 %v61, 64
    %v540 = vpop.permute.xlu0 %539
    %541 = vrot.lane.b32.xlu0 %v62, 64
    %v542 = vpop.permute.xlu0 %541
    %543 = vrot.lane.b32.xlu0 %v63, 64
    %v544 = vpop.permute.xlu0 %543
    %545 = vrot.lane.b32.xlu0 %v64, 64
    %v546 = vpop.permute.xlu0 %545
    %547 = vrot.lane.b32.xlu0 %v65, 64
    %v548 = vpop.permute.xlu0 %547
    %549 = vrot.lane.b32.xlu0 %v66, 64
    %v550 = vpop.permute.xlu0 %549
    %551 = vrot.lane.b32.xlu0 %v67, 64
    %v552 = vpop.permute.xlu0 %551
    %553 = vrot.lane.b32.xlu0 %v68, 64
    %v554 = vpop.permute.xlu0 %553
    %v571 = vmul.f32 %v159, %v524
    %v572 = vmul.f32 %v164, %v526
    %v573 = vmul.f32 %v159, %v528
    %v574 = vmul.f32 %v164, %v530
    %v575 = vmul.f32 %v159, %v532
    %v576 = vmul.f32 %v164, %v534
    %v577 = vmul.f32 %v159, %v536
    %v578 = vmul.f32 %v164, %v538
    %v579 = vmul.f32 %v159, %v540
    %v580 = vmul.f32 %v164, %v542
    %v581 = vmul.f32 %v159, %v544
    %v582 = vmul.f32 %v164, %v546
    %v583 = vmul.f32 %v159, %v548
    %v584 = vmul.f32 %v164, %v550
    %v585 = vmul.f32 %v159, %v552
    %v586 = vmul.f32 %v164, %v554
    %v587 = vmul.f32 %v169, %v524
    %v588 = vmul.f32 %v174, %v526
    %v589 = vmul.f32 %v169, %v528
    %v590 = vmul.f32 %v174, %v530
    %v591 = vmul.f32 %v169, %v532
    %v592 = vmul.f32 %v174, %v534
    %v593 = vmul.f32 %v169, %v536
    %v594 = vmul.f32 %v174, %v538
    %v595 = vmul.f32 %v169, %v540
    %v596 = vmul.f32 %v174, %v542
    %v597 = vmul.f32 %v169, %v544
    %v598 = vmul.f32 %v174, %v546
    %v599 = vmul.f32 %v169, %v548
    %v600 = vmul.f32 %v174, %v550
    %v601 = vmul.f32 %v169, %v552
    %v602 = vmul.f32 %v174, %v554
    %v604 = vsel %vm79, %v177, 0
    %v607 = vsel %vm79, %v178, 0
    %609 = vmatprep.subr.mxu0 0.0
    %610 = vmatpush1.msra.mxu0 0.0
    %611 = vmatprep.subr.mxu0 0.0
    %612 = vmatpush1.msra.mxu0 0.0
    %613 = vmatprep.subr.mxu0 0.0
    %614 = vmatpush1.msra.mxu0 0.0
    %615 = vmatprep.subr.mxu0 0.0
    %616 = vmatpush1.msra.mxu0 0.0
    %617 = vmatprep.subr.mxu0 0.0
    %618 = vmatpush1.msra.mxu0 0.0
    %619 = vmatprep.subr.mxu0 0.0
    %620 = vmatpush1.msra.mxu0 0.0
    %621 = vmatprep.subr.mxu0 0.0
    %622 = vmatpush1.msra.mxu0 0.0
    %623 = vmatprep.subr.mxu0 0.0
    %624 = vmatpush1.msra.mxu0 0.0
    %625 = vmatprep.subr.mxu0 0.0
    %626 = vmatpush1.msra.mxu0 0.0
    %627 = vmatprep.subr.mxu0 0.0
    %628 = vmatpush1.msra.mxu0 0.0
    %629 = vmatprep.subr.mxu0 0.0
    %630 = vmatpush1.msra.mxu0 0.0
    %631 = vmatprep.subr.mxu0 0.0
    %632 = vmatpush1.msra.mxu0 0.0
    %633 = vmatprep.subr.mxu0 0.0
    %634 = vmatpush1.msra.mxu0 %v502
    %635 = vmatprep.subr.mxu0 0.0
    %636 = vmatpush1.msra.mxu0 %v501
    %637 = vmatprep.subr.mxu0 0.0
    %638 = vmatpush1.msra.mxu0 %v500
    %639 = vmatprep.subr.mxu0 0.0
    %640 = vmatpush1.msra.mxu0 %v499
    %641 = vmatprep.subr.mxu0 0.0
    %642 = vmatpush2.msra.mxu0 0.0
    %643 = vmatprep.subr.mxu0 0.0
    %644 = vmatpush2.msra.mxu0 0.0
    %645 = vmatprep.subr.mxu0 0.0
    %646 = vmatpush2.msra.mxu0 0.0
    %647 = vmatprep.subr.mxu0 0.0
    %648 = vmatpush2.msra.mxu0 0.0
    %649 = vmatprep.subr.mxu0 0.0
    %650 = vmatpush2.msra.mxu0 0.0
    %651 = vmatprep.subr.mxu0 0.0
    %652 = vmatpush2.msra.mxu0 0.0
    %653 = vmatprep.subr.mxu0 0.0
    %654 = vmatpush2.msra.mxu0 0.0
    %655 = vmatprep.subr.mxu0 0.0
    %656 = vmatpush2.msra.mxu0 0.0
    %657 = vmatprep.subr.mxu0 0.0
    %658 = vmatpush2.msra.mxu0 0.0
    %659 = vmatprep.subr.mxu0 0.0
    %660 = vmatpush2.msra.mxu0 0.0
    %661 = vmatprep.subr.mxu0 0.0
    %662 = vmatpush2.msra.mxu0 0.0
    %663 = vmatprep.subr.mxu0 0.0
    %664 = vmatpush2.msra.mxu0 0.0
    %665 = vmatprep.subr.mxu0 0.0
    %666 = vmatpush2.msra.mxu0 0.0
    %667 = vmatprep.subr.mxu0 0.0
    %668 = vmatpush2.msra.mxu0 0.0
    %669 = vmatprep.subr.mxu0 0.0
    %670 = vmatpush2.msra.mxu0 0.0
    %671 = vmatprep.subr.mxu0 0.0
    %672 = vmatpush2.msra.mxu0 0.0
    %673 = vmatprep.mubr.f32.mxu0 0.0
    %674 = vmatmul.mubr.f32.gmra.mxu0 %v604
    %v675 = vpop.f32.mrf.mxu0
    %v676 = vadd.f32 0.0, %v675
    %v677 = vpop.f32.mrf.mxu0
    %678 = vmatprep.mubr.f32.mxu0 0.0
    %679 = vmatmul.mubr.f32.gmra.mxu0 %v607
    %v680 = vpop.f32.mrf.mxu0
    %v681 = vadd.f32 0.0, %v680
    %v682 = vpop.f32.mrf.mxu0
    %683 = vdwg.mxu0
    %v685 = vsel %vm79, %v179, 0
    %v688 = vsel %vm79, %v180, 0
    %690 = vmatprep.subr.mxu0 0.0
    %691 = vmatpush1.msra.mxu0 0.0
    %692 = vmatprep.subr.mxu0 0.0
    %693 = vmatpush1.msra.mxu0 0.0
    %694 = vmatprep.subr.mxu0 0.0
    %695 = vmatpush1.msra.mxu0 0.0
    %696 = vmatprep.subr.mxu0 0.0
    %697 = vmatpush1.msra.mxu0 0.0
    %698 = vmatprep.subr.mxu0 0.0
    %699 = vmatpush1.msra.mxu0 0.0
    %700 = vmatprep.subr.mxu0 0.0
    %701 = vmatpush1.msra.mxu0 0.0
    %702 = vmatprep.subr.mxu0 0.0
    %703 = vmatpush1.msra.mxu0 0.0
    %704 = vmatprep.subr.mxu0 0.0
    %705 = vmatpush1.msra.mxu0 0.0
    %706 = vmatprep.subr.mxu0 0.0
    %707 = vmatpush1.msra.mxu0 0.0
    %708 = vmatprep.subr.mxu0 0.0
    %709 = vmatpush1.msra.mxu0 0.0
    %710 = vmatprep.subr.mxu0 0.0
    %711 = vmatpush1.msra.mxu0 0.0
    %712 = vmatprep.subr.mxu0 0.0
    %713 = vmatpush1.msra.mxu0 0.0
    %714 = vmatprep.subr.mxu0 0.0
    %715 = vmatpush1.msra.mxu0 %v506
    %716 = vmatprep.subr.mxu0 0.0
    %717 = vmatpush1.msra.mxu0 %v505
    %718 = vmatprep.subr.mxu0 0.0
    %719 = vmatpush1.msra.mxu0 %v504
    %720 = vmatprep.subr.mxu0 0.0
    %721 = vmatpush1.msra.mxu0 %v503
    %722 = vmatprep.subr.mxu0 0.0
    %723 = vmatpush2.msra.mxu0 0.0
    %724 = vmatprep.subr.mxu0 0.0
    %725 = vmatpush2.msra.mxu0 0.0
    %726 = vmatprep.subr.mxu0 0.0
    %727 = vmatpush2.msra.mxu0 0.0
    %728 = vmatprep.subr.mxu0 0.0
    %729 = vmatpush2.msra.mxu0 0.0
    %730 = vmatprep.subr.mxu0 0.0
    %731 = vmatpush2.msra.mxu0 0.0
    %732 = vmatprep.subr.mxu0 0.0
    %733 = vmatpush2.msra.mxu0 0.0
    %734 = vmatprep.subr.mxu0 0.0
    %735 = vmatpush2.msra.mxu0 0.0
    %736 = vmatprep.subr.mxu0 0.0
    %737 = vmatpush2.msra.mxu0 0.0
    %738 = vmatprep.subr.mxu0 0.0
    %739 = vmatpush2.msra.mxu0 0.0
    %740 = vmatprep.subr.mxu0 0.0
    %741 = vmatpush2.msra.mxu0 0.0
    %742 = vmatprep.subr.mxu0 0.0
    %743 = vmatpush2.msra.mxu0 0.0
    %744 = vmatprep.subr.mxu0 0.0
    %745 = vmatpush2.msra.mxu0 0.0
    %746 = vmatprep.subr.mxu0 0.0
    %747 = vmatpush2.msra.mxu0 0.0
    %748 = vmatprep.subr.mxu0 0.0
    %749 = vmatpush2.msra.mxu0 0.0
    %750 = vmatprep.subr.mxu0 0.0
    %751 = vmatpush2.msra.mxu0 0.0
    %752 = vmatprep.subr.mxu0 0.0
    %753 = vmatpush2.msra.mxu0 0.0
    %754 = vmatprep.mubr.f32.mxu0 0.0
    %755 = vmatmul.mubr.f32.gmra.mxu0 %v685
    %v756 = vpop.f32.mrf.mxu0
    %v757 = vadd.f32 0.0, %v756
    %v758 = vpop.f32.mrf.mxu0
    %759 = vmatprep.mubr.f32.mxu0 0.0
    %760 = vmatmul.mubr.f32.gmra.mxu0 %v688
    %v761 = vpop.f32.mrf.mxu0
    %v762 = vadd.f32 0.0, %v761
    %v763 = vpop.f32.mrf.mxu0
    %764 = vdwg.mxu0
    %765 = vmax.xlane.f32.xlu0 %v676
    %v766 = vpop.xlane.xlu0 %765
    %767 = vmax.xlane.f32.xlu0 %v681
    %v768 = vpop.xlane.xlu0 %767
    %769 = vmax.xlane.f32.xlu0 %v757
    %v770 = vpop.xlane.xlu0 %769
    %771 = vmax.xlane.f32.xlu0 %v762
    %v772 = vpop.xlane.xlu0 %771
    %v773 = vsub.f32 %v676, %v766
    %v774 = vsub.f32 %v681, %v768
    %v775 = vsub.f32 %v757, %v770
    %v776 = vsub.f32 %v762, %v772
    %v777 = vmul.f32 %v773, 1.442695
    %v778 = vpow.pop %v777
    %v779 = vmul.f32 %v774, 1.442695
    %v780 = vpow.pop %v779
    %v781 = vmul.f32 %v775, 1.442695
    %v782 = vpow.pop %v781
    %v783 = vmul.f32 %v776, 1.442695
    %v784 = vpow.pop %v783
    %785 = vmatprep.subr.mxu0 0.0
    %786 = vmatpush1.msra.mxu0 %v68
    %787 = vmatprep.subr.mxu0 0.0
    %788 = vmatpush1.msra.mxu0 %v67
    %789 = vmatprep.subr.mxu0 0.0
    %790 = vmatpush1.msra.mxu0 %v66
    %791 = vmatprep.subr.mxu0 0.0
    %792 = vmatpush1.msra.mxu0 %v65
    %793 = vmatprep.subr.mxu0 0.0
    %794 = vmatpush1.msra.mxu0 %v64
    %795 = vmatprep.subr.mxu0 0.0
    %796 = vmatpush1.msra.mxu0 %v63
    %797 = vmatprep.subr.mxu0 0.0
    %798 = vmatpush1.msra.mxu0 %v62
    %799 = vmatprep.subr.mxu0 0.0
    %800 = vmatpush1.msra.mxu0 %v61
    %801 = vmatprep.subr.mxu0 0.0
    %802 = vmatpush1.msra.mxu0 %v60
    %803 = vmatprep.subr.mxu0 0.0
    %804 = vmatpush1.msra.mxu0 %v59
    %805 = vmatprep.subr.mxu0 0.0
    %806 = vmatpush1.msra.mxu0 %v58
    %807 = vmatprep.subr.mxu0 0.0
    %808 = vmatpush1.msra.mxu0 %v57
    %809 = vmatprep.subr.mxu0 0.0
    %810 = vmatpush1.msra.mxu0 %v56
    %811 = vmatprep.subr.mxu0 0.0
    %812 = vmatpush1.msra.mxu0 %v55
    %813 = vmatprep.subr.mxu0 0.0
    %814 = vmatpush1.msra.mxu0 %v54
    %815 = vmatprep.subr.mxu0 0.0
    %816 = vmatpush1.msra.mxu0 %v53
    %817 = vmatprep.subr.mxu0 0.0
    %818 = vmatpush2.msra.mxu0 0.0
    %819 = vmatprep.subr.mxu0 0.0
    %820 = vmatpush2.msra.mxu0 0.0
    %821 = vmatprep.subr.mxu0 0.0
    %822 = vmatpush2.msra.mxu0 0.0
    %823 = vmatprep.subr.mxu0 0.0
    %824 = vmatpush2.msra.mxu0 0.0
    %825 = vmatprep.subr.mxu0 0.0
    %826 = vmatpush2.msra.mxu0 0.0
    %827 = vmatprep.subr.mxu0 0.0
    %828 = vmatpush2.msra.mxu0 0.0
    %829 = vmatprep.subr.mxu0 0.0
    %830 = vmatpush2.msra.mxu0 0.0
    %831 = vmatprep.subr.mxu0 0.0
    %832 = vmatpush2.msra.mxu0 0.0
    %833 = vmatprep.subr.mxu0 0.0
    %834 = vmatpush2.msra.mxu0 0.0
    %835 = vmatprep.subr.mxu0 0.0
    %836 = vmatpush2.msra.mxu0 0.0
    %837 = vmatprep.subr.mxu0 0.0
    %838 = vmatpush2.msra.mxu0 0.0
    %839 = vmatprep.subr.mxu0 0.0
    %840 = vmatpush2.msra.mxu0 0.0
    %841 = vmatprep.subr.mxu0 0.0
    %842 = vmatpush2.msra.mxu0 0.0
    %843 = vmatprep.subr.mxu0 0.0
    %844 = vmatpush2.msra.mxu0 0.0
    %845 = vmatprep.subr.mxu0 0.0
    %846 = vmatpush2.msra.mxu0 0.0
    %847 = vmatprep.subr.mxu0 0.0
    %848 = vmatpush2.msra.mxu0 0.0
    %849 = vmatprep.mubr.f32.mxu0 0.0
    %850 = vmatmul.mubr.f32.gmra.mxu0 %v778
    %v851 = vpop.f32.mrf.mxu0
    %v852 = vadd.f32 0.0, %v851
    %v853 = vpop.f32.mrf.mxu0
    %854 = vmatprep.mubr.f32.mxu0 0.0
    %855 = vmatmul.mubr.f32.gmra.mxu0 %v780
    %v856 = vpop.f32.mrf.mxu0
    %v857 = vadd.f32 0.0, %v856
    %v858 = vpop.f32.mrf.mxu0
    %859 = vmatprep.mubr.f32.mxu0 0.0
    %860 = vmatmul.mubr.f32.gmra.mxu0 %v782
    %v861 = vpop.f32.mrf.mxu0
    %v862 = vadd.f32 0.0, %v861
    %v863 = vpop.f32.mrf.mxu0
    %864 = vmatprep.mubr.f32.mxu0 0.0
    %865 = vmatmul.mubr.f32.gmra.mxu0 %v784
    %v866 = vpop.f32.mrf.mxu0
    %v867 = vadd.f32 0.0, %v866
    %v868 = vpop.f32.mrf.mxu0
    %869 = vdwg.mxu0
    %886 = vrot.lane.b32.xlu0 %v571, 64
    %v887 = vpop.permute.xlu0 %886
    %888 = vrot.lane.b32.xlu0 %v572, 64
    %v889 = vpop.permute.xlu0 %888
    %890 = vrot.lane.b32.xlu0 %v573, 64
    %v891 = vpop.permute.xlu0 %890
    %892 = vrot.lane.b32.xlu0 %v574, 64
    %v893 = vpop.permute.xlu0 %892
    %894 = vrot.lane.b32.xlu0 %v575, 64
    %v895 = vpop.permute.xlu0 %894
    %896 = vrot.lane.b32.xlu0 %v576, 64
    %v897 = vpop.permute.xlu0 %896
    %898 = vrot.lane.b32.xlu0 %v577, 64
    %v899 = vpop.permute.xlu0 %898
    %900 = vrot.lane.b32.xlu0 %v578, 64
    %v901 = vpop.permute.xlu0 %900
    %902 = vrot.lane.b32.xlu0 %v579, 64
    %v903 = vpop.permute.xlu0 %902
    %904 = vrot.lane.b32.xlu0 %v580, 64
    %v905 = vpop.permute.xlu0 %904
    %906 = vrot.lane.b32.xlu0 %v581, 64
    %v907 = vpop.permute.xlu0 %906
    %908 = vrot.lane.b32.xlu0 %v582, 64
    %v909 = vpop.permute.xlu0 %908
    %910 = vrot.lane.b32.xlu0 %v583, 64
    %v911 = vpop.permute.xlu0 %910
    %912 = vrot.lane.b32.xlu0 %v584, 64
    %v913 = vpop.permute.xlu0 %912
    %914 = vrot.lane.b32.xlu0 %v585, 64
    %v915 = vpop.permute.xlu0 %914
    %916 = vrot.lane.b32.xlu0 %v586, 64
    %v917 = vpop.permute.xlu0 %916
    %934 = vmatprep.subr.mxu0 0.0
    %935 = vmatpush1.msra.mxu0 %v917
    %936 = vmatprep.subr.mxu0 0.0
    %937 = vmatpush1.msra.mxu0 %v915
    %938 = vmatprep.subr.mxu0 0.0
    %939 = vmatpush1.msra.mxu0 %v913
    %940 = vmatprep.subr.mxu0 0.0
    %941 = vmatpush1.msra.mxu0 %v911
    %942 = vmatprep.subr.mxu0 0.0
    %943 = vmatpush1.msra.mxu0 %v909
    %944 = vmatprep.subr.mxu0 0.0
    %945 = vmatpush1.msra.mxu0 %v907
    %946 = vmatprep.subr.mxu0 0.0
    %947 = vmatpush1.msra.mxu0 %v905
    %948 = vmatprep.subr.mxu0 0.0
    %949 = vmatpush1.msra.mxu0 %v903
    %950 = vmatprep.subr.mxu0 0.0
    %951 = vmatpush1.msra.mxu0 %v901
    %952 = vmatprep.subr.mxu0 0.0
    %953 = vmatpush1.msra.mxu0 %v899
    %954 = vmatprep.subr.mxu0 0.0
    %955 = vmatpush1.msra.mxu0 %v897
    %956 = vmatprep.subr.mxu0 0.0
    %957 = vmatpush1.msra.mxu0 %v895
    %958 = vmatprep.subr.mxu0 0.0
    %959 = vmatpush1.msra.mxu0 %v893
    %960 = vmatprep.subr.mxu0 0.0
    %961 = vmatpush1.msra.mxu0 %v891
    %962 = vmatprep.subr.mxu0 0.0
    %963 = vmatpush1.msra.mxu0 %v889
    %964 = vmatprep.subr.mxu0 0.0
    %965 = vmatpush1.msra.mxu0 %v887
    %966 = vmatprep.subr.mxu0 0.0
    %967 = vmatpush2.msra.mxu0 0.0
    %968 = vmatprep.subr.mxu0 0.0
    %969 = vmatpush2.msra.mxu0 0.0
    %970 = vmatprep.subr.mxu0 0.0
    %971 = vmatpush2.msra.mxu0 0.0
    %972 = vmatprep.subr.mxu0 0.0
    %973 = vmatpush2.msra.mxu0 0.0
    %974 = vmatprep.subr.mxu0 0.0
    %975 = vmatpush2.msra.mxu0 0.0
    %976 = vmatprep.subr.mxu0 0.0
    %977 = vmatpush2.msra.mxu0 0.0
    %978 = vmatprep.subr.mxu0 0.0
    %979 = vmatpush2.msra.mxu0 0.0
    %980 = vmatprep.subr.mxu0 0.0
    %981 = vmatpush2.msra.mxu0 0.0
    %982 = vmatprep.subr.mxu0 0.0
    %983 = vmatpush2.msra.mxu0 0.0
    %984 = vmatprep.subr.mxu0 0.0
    %985 = vmatpush2.msra.mxu0 0.0
    %986 = vmatprep.subr.mxu0 0.0
    %987 = vmatpush2.msra.mxu0 0.0
    %988 = vmatprep.subr.mxu0 0.0
    %989 = vmatpush2.msra.mxu0 0.0
    %990 = vmatprep.subr.mxu0 0.0
    %991 = vmatpush2.msra.mxu0 0.0
    %992 = vmatprep.subr.mxu0 0.0
    %993 = vmatpush2.msra.mxu0 0.0
    %994 = vmatprep.subr.mxu0 0.0
    %995 = vmatpush2.msra.mxu0 0.0
    %996 = vmatprep.subr.mxu0 0.0
    %997 = vmatpush2.msra.mxu0 0.0
    %998 = vmatprep.mubr.f32.mxu0 0.0
    %999 = vmatmul.mubr.f32.gmra.mxu0 %v778
    %v1000 = vpop.f32.mrf.mxu0
    %v1001 = vadd.f32 0.0, %v1000
    %v1002 = vpop.f32.mrf.mxu0
    %1003 = vmatprep.mubr.f32.mxu0 0.0
    %1004 = vmatmul.mubr.f32.gmra.mxu0 %v780
    %v1005 = vpop.f32.mrf.mxu0
    %v1006 = vadd.f32 0.0, %v1005
    %v1007 = vpop.f32.mrf.mxu0
    %1008 = vdwg.mxu0
    %1025 = vrot.lane.b32.xlu0 %v587, 64
    %v1026 = vpop.permute.xlu0 %1025
    %1027 = vrot.lane.b32.xlu0 %v588, 64
    %v1028 = vpop.permute.xlu0 %1027
    %1029 = vrot.lane.b32.xlu0 %v589, 64
    %v1030 = vpop.permute.xlu0 %1029
    %1031 = vrot.lane.b32.xlu0 %v590, 64
    %v1032 = vpop.permute.xlu0 %1031
    %1033 = vrot.lane.b32.xlu0 %v591, 64
    %v1034 = vpop.permute.xlu0 %1033
    %1035 = vrot.lane.b32.xlu0 %v592, 64
    %v1036 = vpop.permute.xlu0 %1035
    %1037 = vrot.lane.b32.xlu0 %v593, 64
    %v1038 = vpop.permute.xlu0 %1037
    %1039 = vrot.lane.b32.xlu0 %v594, 64
    %v1040 = vpop.permute.xlu0 %1039
    %1041 = vrot.lane.b32.xlu0 %v595, 64
    %v1042 = vpop.permute.xlu0 %1041
    %1043 = vrot.lane.b32.xlu0 %v596, 64
    %v1044 = vpop.permute.xlu0 %1043
    %1045 = vrot.lane.b32.xlu0 %v597, 64
    %v1046 = vpop.permute.xlu0 %1045
    %1047 = vrot.lane.b32.xlu0 %v598, 64
    %v1048 = vpop.permute.xlu0 %1047
    %1049 = vrot.lane.b32.xlu0 %v599, 64
    %v1050 = vpop.permute.xlu0 %1049
    %1051 = vrot.lane.b32.xlu0 %v600, 64
    %v1052 = vpop.permute.xlu0 %1051
    %1053 = vrot.lane.b32.xlu0 %v601, 64
    %v1054 = vpop.permute.xlu0 %1053
    %1055 = vrot.lane.b32.xlu0 %v602, 64
    %v1056 = vpop.permute.xlu0 %1055
    %1073 = vmatprep.subr.mxu0 0.0
    %1074 = vmatpush1.msra.mxu0 %v1056
    %1075 = vmatprep.subr.mxu0 0.0
    %1076 = vmatpush1.msra.mxu0 %v1054
    %1077 = vmatprep.subr.mxu0 0.0
    %1078 = vmatpush1.msra.mxu0 %v1052
    %1079 = vmatprep.subr.mxu0 0.0
    %1080 = vmatpush1.msra.mxu0 %v1050
    %1081 = vmatprep.subr.mxu0 0.0
    %1082 = vmatpush1.msra.mxu0 %v1048
    %1083 = vmatprep.subr.mxu0 0.0
    %1084 = vmatpush1.msra.mxu0 %v1046
    %1085 = vmatprep.subr.mxu0 0.0
    %1086 = vmatpush1.msra.mxu0 %v1044
    %1087 = vmatprep.subr.mxu0 0.0
    %1088 = vmatpush1.msra.mxu0 %v1042
    %1089 = vmatprep.subr.mxu0 0.0
    %1090 = vmatpush1.msra.mxu0 %v1040
    %1091 = vmatprep.subr.mxu0 0.0
    %1092 = vmatpush1.msra.mxu0 %v1038
    %1093 = vmatprep.subr.mxu0 0.0
    %1094 = vmatpush1.msra.mxu0 %v1036
    %1095 = vmatprep.subr.mxu0 0.0
    %1096 = vmatpush1.msra.mxu0 %v1034
    %1097 = vmatprep.subr.mxu0 0.0
    %1098 = vmatpush1.msra.mxu0 %v1032
    %1099 = vmatprep.subr.mxu0 0.0
    %1100 = vmatpush1.msra.mxu0 %v1030
    %1101 = vmatprep.subr.mxu0 0.0
    %1102 = vmatpush1.msra.mxu0 %v1028
    %1103 = vmatprep.subr.mxu0 0.0
    %1104 = vmatpush1.msra.mxu0 %v1026
    %1105 = vmatprep.subr.mxu0 0.0
    %1106 = vmatpush2.msra.mxu0 0.0
    %1107 = vmatprep.subr.mxu0 0.0
    %1108 = vmatpush2.msra.mxu0 0.0
    %1109 = vmatprep.subr.mxu0 0.0
    %1110 = vmatpush2.msra.mxu0 0.0
    %1111 = vmatprep.subr.mxu0 0.0
    %1112 = vmatpush2.msra.mxu0 0.0
    %1113 = vmatprep.subr.mxu0 0.0
    %1114 = vmatpush2.msra.mxu0 0.0
    %1115 = vmatprep.subr.mxu0 0.0
    %1116 = vmatpush2.msra.mxu0 0.0
    %1117 = vmatprep.subr.mxu0 0.0
    %1118 = vmatpush2.msra.mxu0 0.0
    %1119 = vmatprep.subr.mxu0 0.0
    %1120 = vmatpush2.msra.mxu0 0.0
    %1121 = vmatprep.subr.mxu0 0.0
    %1122 = vmatpush2.msra.mxu0 0.0
    %1123 = vmatprep.subr.mxu0 0.0
    %1124 = vmatpush2.msra.mxu0 0.0
    %1125 = vmatprep.subr.mxu0 0.0
    %1126 = vmatpush2.msra.mxu0 0.0
    %1127 = vmatprep.subr.mxu0 0.0
    %1128 = vmatpush2.msra.mxu0 0.0
    %1129 = vmatprep.subr.mxu0 0.0
    %1130 = vmatpush2.msra.mxu0 0.0
    %1131 = vmatprep.subr.mxu0 0.0
    %1132 = vmatpush2.msra.mxu0 0.0
    %1133 = vmatprep.subr.mxu0 0.0
    %1134 = vmatpush2.msra.mxu0 0.0
    %1135 = vmatprep.subr.mxu0 0.0
    %1136 = vmatpush2.msra.mxu0 0.0
    %1137 = vmatprep.mubr.f32.mxu0 0.0
    %1138 = vmatmul.mubr.f32.gmra.mxu0 %v782
    %v1139 = vpop.f32.mrf.mxu0
    %v1140 = vadd.f32 0.0, %v1139
    %v1141 = vpop.f32.mrf.mxu0
    %1142 = vmatprep.mubr.f32.mxu0 0.0
    %1143 = vmatmul.mubr.f32.gmra.mxu0 %v784
    %v1144 = vpop.f32.mrf.mxu0
    %v1145 = vadd.f32 0.0, %v1144
    %v1146 = vpop.f32.mrf.mxu0
    %1147 = vdwg.mxu0
    %v1148 = vrcp.pop %v852
    %v1149 = vmul.f32 %v1001, %v1148
    %v1150 = vrcp.pop %v857
    %v1151 = vmul.f32 %v1006, %v1150
    %v1152 = vrcp.pop %v862
    %v1153 = vmul.f32 %v1140, %v1152
    %v1154 = vrcp.pop %v867
    %v1155 = vmul.f32 %v1145, %v1154
    %v1156 = vlaneseq
    %v1157 = vshrl.u32 %v1156, 7
    %v1158 = vsub.s32 0, %v1157
    %v1159 = vrot.slane %v69, %v1158
    %v1161 = vsel %vm79, %v1149, 0
    %v1164 = vsel %vm79, %v1151, 0
    %v1167 = vsel %vm79, %v1153, 0
    %v1170 = vsel %vm79, %v1155, 0
    %1172 = vmatprep.subr.mxu0 0.0
    %1173 = vmatpush1.msra.mxu0 0.0
    %1174 = vmatprep.subr.mxu0 0.0
    %1175 = vmatpush1.msra.mxu0 0.0
    %1176 = vmatprep.subr.mxu0 0.0
    %1177 = vmatpush1.msra.mxu0 0.0
    %1178 = vmatprep.subr.mxu0 0.0
    %1179 = vmatpush1.msra.mxu0 0.0
    %1180 = vmatprep.subr.mxu0 0.0
    %1181 = vmatpush1.msra.mxu0 0.0
    %1182 = vmatprep.subr.mxu0 0.0
    %1183 = vmatpush1.msra.mxu0 0.0
    %1184 = vmatprep.subr.mxu0 0.0
    %1185 = vmatpush1.msra.mxu0 0.0
    %1186 = vmatprep.subr.mxu0 0.0
    %1187 = vmatpush1.msra.mxu0 0.0
    %1188 = vmatprep.subr.mxu0 0.0
    %1189 = vmatpush1.msra.mxu0 0.0
    %1190 = vmatprep.subr.mxu0 0.0
    %1191 = vmatpush1.msra.mxu0 0.0
    %1192 = vmatprep.subr.mxu0 0.0
    %1193 = vmatpush1.msra.mxu0 0.0
    %1194 = vmatprep.subr.mxu0 0.0
    %1195 = vmatpush1.msra.mxu0 0.0
    %1196 = vmatprep.subr.mxu0 0.0
    %1197 = vmatpush1.msra.mxu0 %v36
    %1198 = vmatprep.subr.mxu0 0.0
    %1199 = vmatpush1.msra.mxu0 %v35
    %1200 = vmatprep.subr.mxu0 0.0
    %1201 = vmatpush1.msra.mxu0 %v34
    %1202 = vmatprep.subr.mxu0 0.0
    %1203 = vmatpush1.msra.mxu0 %v33
    %1204 = vmatprep.subr.mxu0 0.0
    %1205 = vmatpush2.msra.mxu0 0.0
    %1206 = vmatprep.subr.mxu0 0.0
    %1207 = vmatpush2.msra.mxu0 0.0
    %1208 = vmatprep.subr.mxu0 0.0
    %1209 = vmatpush2.msra.mxu0 0.0
    %1210 = vmatprep.subr.mxu0 0.0
    %1211 = vmatpush2.msra.mxu0 0.0
    %1212 = vmatprep.subr.mxu0 0.0
    %1213 = vmatpush2.msra.mxu0 0.0
    %1214 = vmatprep.subr.mxu0 0.0
    %1215 = vmatpush2.msra.mxu0 0.0
    %1216 = vmatprep.subr.mxu0 0.0
    %1217 = vmatpush2.msra.mxu0 0.0
    %1218 = vmatprep.subr.mxu0 0.0
    %1219 = vmatpush2.msra.mxu0 0.0
    %1220 = vmatprep.subr.mxu0 0.0
    %1221 = vmatpush2.msra.mxu0 0.0
    %1222 = vmatprep.subr.mxu0 0.0
    %1223 = vmatpush2.msra.mxu0 0.0
    %1224 = vmatprep.subr.mxu0 0.0
    %1225 = vmatpush2.msra.mxu0 0.0
    %1226 = vmatprep.subr.mxu0 0.0
    %1227 = vmatpush2.msra.mxu0 0.0
    %1228 = vmatprep.subr.mxu0 0.0
    %1229 = vmatpush2.msra.mxu0 0.0
    %1230 = vmatprep.subr.mxu0 0.0
    %1231 = vmatpush2.msra.mxu0 0.0
    %1232 = vmatprep.subr.mxu0 0.0
    %1233 = vmatpush2.msra.mxu0 0.0
    %1234 = vmatprep.subr.mxu0 0.0
    %1235 = vmatpush2.msra.mxu0 0.0
    %1236 = vmatprep.mubr.f32.mxu0 0.0
    %1237 = vmatmul.mubr.f32.gmra.mxu0 %v1161
    %v1238 = vpop.f32.mrf.mxu0
    %v1239 = vadd.f32 %v1159, %v1238
    %v1240 = vpop.f32.mrf.mxu0
    %1241 = vmatprep.mubr.f32.mxu0 0.0
    %1242 = vmatmul.mubr.f32.gmra.mxu0 %v1164
    %v1243 = vpop.f32.mrf.mxu0
    %v1244 = vadd.f32 %v1159, %v1243
    %v1245 = vpop.f32.mrf.mxu0
    %1246 = vmatprep.mubr.f32.mxu0 0.0
    %1247 = vmatmul.mubr.f32.gmra.mxu0 %v1167
    %v1248 = vpop.f32.mrf.mxu0
    %v1249 = vadd.f32 %v1159, %v1248
    %v1250 = vpop.f32.mrf.mxu0
    %1251 = vmatprep.mubr.f32.mxu0 0.0
    %1252 = vmatmul.mubr.f32.gmra.mxu0 %v1170
    %v1253 = vpop.f32.mrf.mxu0
    %v1254 = vadd.f32 %v1159, %v1253
    %v1255 = vpop.f32.mrf.mxu0
    %1256 = vdwg.mxu0
    %v1257 = vadd.f32 %v15, %v1239
    %v1258 = vadd.f32 %v16, %v1244
    %v1259 = vadd.f32 %v17, %v1249
    %v1260 = vadd.f32 %v18, %v1254
    %v1261 = vsel %vm79, %v1257, 0.0
    %1262 = vadd.xlane.f32.xlu0 %v1261
    %v1263 = vpop.xlane.xlu0 %1262
    %v1264 = vsel %vm79, %v1258, 0.0
    %1265 = vadd.xlane.f32.xlu0 %v1264
    %v1266 = vpop.xlane.xlu0 %1265
    %v1267 = vsel %vm79, %v1259, 0.0
    %1268 = vadd.xlane.f32.xlu0 %v1267
    %v1269 = vpop.xlane.xlu0 %1268
    %v1270 = vsel %vm79, %v1260, 0.0
    %1271 = vadd.xlane.f32.xlu0 %v1270
    %v1272 = vpop.xlane.xlu0 %1271
    %v1273 = vrcp.pop 32.0
    %v1274 = vmul.f32 %v1263, %v1273
    %v1275 = vmul.f32 %v1266, %v1273
    %v1276 = vmul.f32 %v1269, %v1273
    %v1277 = vmul.f32 %v1272, %v1273
    %v1278 = vsub.f32 %v1257, %v1274
    %v1279 = vsub.f32 %v1258, %v1275
    %v1280 = vsub.f32 %v1259, %v1276
    %v1281 = vsub.f32 %v1260, %v1277
    %v1282 = vmul.f32 %v1278, %v1278
    %v1283 = vmul.f32 %v1279, %v1279
    %v1284 = vmul.f32 %v1280, %v1280
    %v1285 = vmul.f32 %v1281, %v1281
    %v1286 = vsel %vm79, %v1282, 0.0
    %1287 = vadd.xlane.f32.xlu0 %v1286
    %v1288 = vpop.xlane.xlu0 %1287
    %v1289 = vsel %vm79, %v1283, 0.0
    %1290 = vadd.xlane.f32.xlu0 %v1289
    %v1291 = vpop.xlane.xlu0 %1290
    %v1292 = vsel %vm79, %v1284, 0.0
    %1293 = vadd.xlane.f32.xlu0 %v1292
    %v1294 = vpop.xlane.xlu0 %1293
    %v1295 = vsel %vm79, %v1285, 0.0
    %1296 = vadd.xlane.f32.xlu0 %v1295
    %v1297 = vpop.xlane.xlu0 %1296
    %v1298 = vmul.f32 %v1288, %v1273
    %v1299 = vmul.f32 %v1291, %v1273
    %v1300 = vmul.f32 %v1294, %v1273
    %v1301 = vmul.f32 %v1297, %v1273
    %v1302 = vadd.f32 %v1298, 1e-05
    %v1303 = vadd.f32 %v1299, 1e-05
    %v1304 = vadd.f32 %v1300, 1e-05
    %v1305 = vadd.f32 %v1301, 1e-05
    %v1306 = vrsqrt.pop %v1302
    %v1307 = vrsqrt.pop %v1303
    %v1308 = vrsqrt.pop %v1304
    %v1309 = vrsqrt.pop %v1305
    %v1310 = vmul.f32 %v1278, %v1306
    %v1311 = vmul.f32 %v1279, %v1307
    %v1312 = vmul.f32 %v1280, %v1308
    %v1313 = vmul.f32 %v1281, %v1309
    %v1314 = vlaneseq
    %v1315 = vshrl.u32 %v1314, 7
    %v1316 = vsub.s32 0, %v1315
    %v1317 = vrot.slane %v71, %v1316
    %v1318 = vmul.f32 %v1310, %v1317
    %v1319 = vmul.f32 %v1311, %v1317
    %v1320 = vmul.f32 %v1312, %v1317
    %v1321 = vmul.f32 %v1313, %v1317
    %v1322 = vlaneseq
    %v1323 = vshrl.u32 %v1322, 7
    %v1324 = vsub.s32 0, %v1323
    %v1325 = vrot.slane %v72, %v1324
    %v1326 = vadd.f32 %v1318, %v1325
    %v1327 = vadd.f32 %v1319, %v1325
    %v1328 = vadd.f32 %v1320, %v1325
    %v1329 = vadd.f32 %v1321, %v1325
    %v1330 = vlaneseq
    %v1331 = vshrl.u32 %v1330, 7
    %v1332 = vsub.s32 0, %v1331
    %v1333 = vrot.slane %v32, %v1332
    %v1335 = vsel %vm79, %v1326, 0
    %v1338 = vsel %vm79, %v1327, 0
    %v1341 = vsel %vm79, %v1328, 0
    %v1344 = vsel %vm79, %v1329, 0
    %1346 = vmatprep.subr.mxu0 0.0
    %1347 = vmatpush1.msra.mxu0 0.0
    %1348 = vmatprep.subr.mxu0 0.0
    %1349 = vmatpush1.msra.mxu0 0.0
    %1350 = vmatprep.subr.mxu0 0.0
    %1351 = vmatpush1.msra.mxu0 0.0
    %1352 = vmatprep.subr.mxu0 0.0
    %1353 = vmatpush1.msra.mxu0 0.0
    %1354 = vmatprep.subr.mxu0 0.0
    %1355 = vmatpush1.msra.mxu0 0.0
    %1356 = vmatprep.subr.mxu0 0.0
    %1357 = vmatpush1.msra.mxu0 0.0
    %1358 = vmatprep.subr.mxu0 0.0
    %1359 = vmatpush1.msra.mxu0 0.0
    %1360 = vmatprep.subr.mxu0 0.0
    %1361 = vmatpush1.msra.mxu0 0.0
    %1362 = vmatprep.subr.mxu0 0.0
    %1363 = vmatpush1.msra.mxu0 0.0
    %1364 = vmatprep.subr.mxu0 0.0
    %1365 = vmatpush1.msra.mxu0 0.0
    %1366 = vmatprep.subr.mxu0 0.0
    %1367 = vmatpush1.msra.mxu0 0.0
    %1368 = vmatprep.subr.mxu0 0.0
    %1369 = vmatpush1.msra.mxu0 0.0
    %1370 = vmatprep.subr.mxu0 0.0
    %1371 = vmatpush1.msra.mxu0 %v26
    %1372 = vmatprep.subr.mxu0 0.0
    %1373 = vmatpush1.msra.mxu0 %v25
    %1374 = vmatprep.subr.mxu0 0.0
    %1375 = vmatpush1.msra.mxu0 %v24
    %1376 = vmatprep.subr.mxu0 0.0
    %1377 = vmatpush1.msra.mxu0 %v23
    %1378 = vmatprep.subr.mxu0 0.0
    %1379 = vmatpush2.msra.mxu0 0.0
    %1380 = vmatprep.subr.mxu0 0.0
    %1381 = vmatpush2.msra.mxu0 0.0
    %1382 = vmatprep.subr.mxu0 0.0
    %1383 = vmatpush2.msra.mxu0 0.0
    %1384 = vmatprep.subr.mxu0 0.0
    %1385 = vmatpush2.msra.mxu0 0.0
    %1386 = vmatprep.subr.mxu0 0.0
    %1387 = vmatpush2.msra.mxu0 0.0
    %1388 = vmatprep.subr.mxu0 0.0
    %1389 = vmatpush2.msra.mxu0 0.0
    %1390 = vmatprep.subr.mxu0 0.0
    %1391 = vmatpush2.msra.mxu0 0.0
    %1392 = vmatprep.subr.mxu0 0.0
    %1393 = vmatpush2.msra.mxu0 0.0
    %1394 = vmatprep.subr.mxu0 0.0
    %1395 = vmatpush2.msra.mxu0 0.0
    %1396 = vmatprep.subr.mxu0 0.0
    %1397 = vmatpush2.msra.mxu0 0.0
    %1398 = vmatprep.subr.mxu0 0.0
    %1399 = vmatpush2.msra.mxu0 0.0
    %1400 = vmatprep.subr.mxu0 0.0
    %1401 = vmatpush2.msra.mxu0 0.0
    %1402 = vmatprep.subr.mxu0 0.0
    %1403 = vmatpush2.msra.mxu0 0.0
    %1404 = vmatprep.subr.mxu0 0.0
    %1405 = vmatpush2.msra.mxu0 0.0
    %1406 = vmatprep.subr.mxu0 0.0
    %1407 = vmatpush2.msra.mxu0 0.0
    %1408 = vmatprep.subr.mxu0 0.0
    %1409 = vmatpush2.msra.mxu0 0.0
    %1410 = vmatprep.mubr.f32.mxu0 0.0
    %1411 = vmatmul.mubr.f32.gmra.mxu0 %v1335
    %v1412 = vpop.f32.mrf.mxu0
    %v1413 = vadd.f32 %v1333, %v1412
    %v1414 = vpop.f32.mrf.mxu0
    %1415 = vmatprep.mubr.f32.mxu0 0.0
    %1416 = vmatmul.mubr.f32.gmra.mxu0 %v1338
    %v1417 = vpop.f32.mrf.mxu0
    %v1418 = vadd.f32 %v1333, %v1417
    %v1419 = vpop.f32.mrf.mxu0
    %1420 = vmatprep.mubr.f32.mxu0 0.0
    %1421 = vmatmul.mubr.f32.gmra.mxu0 %v1341
    %v1422 = vpop.f32.mrf.mxu0
    %v1423 = vadd.f32 %v1333, %v1422
    %v1424 = vpop.f32.mrf.mxu0
    %1425 = vmatprep.mubr.f32.mxu0 0.0
    %1426 = vmatmul.mubr.f32.gmra.mxu0 %v1344
    %v1427 = vpop.f32.mrf.mxu0
    %v1428 = vadd.f32 %v1333, %v1427
    %v1429 = vpop.f32.mrf.mxu0
    %1430 = vdwg.mxu0
    %v1431 = vmax.f32 %v1413, 0.0
    %v1432 = vmax.f32 %v1418, 0.0
    %v1433 = vmax.f32 %v1423, 0.0
    %v1434 = vmax.f32 %v1428, 0.0
    %v1435 = vlaneseq
    %v1436 = vshrl.u32 %v1435, 7
    %v1437 = vsub.s32 0, %v1436
    %v1438 = vrot.slane %v70, %v1437
    %1439 = vmatprep.subr.mxu0 0.0
    %1440 = vmatpush1.msra.mxu0 %v52
    %1441 = vmatprep.subr.mxu0 0.0
    %1442 = vmatpush1.msra.mxu0 %v51
    %1443 = vmatprep.subr.mxu0 0.0
    %1444 = vmatpush1.msra.mxu0 %v50
    %1445 = vmatprep.subr.mxu0 0.0
    %1446 = vmatpush1.msra.mxu0 %v49
    %1447 = vmatprep.subr.mxu0 0.0
    %1448 = vmatpush1.msra.mxu0 %v48
    %1449 = vmatprep.subr.mxu0 0.0
    %1450 = vmatpush1.msra.mxu0 %v47
    %1451 = vmatprep.subr.mxu0 0.0
    %1452 = vmatpush1.msra.mxu0 %v46
    %1453 = vmatprep.subr.mxu0 0.0
    %1454 = vmatpush1.msra.mxu0 %v45
    %1455 = vmatprep.subr.mxu0 0.0
    %1456 = vmatpush1.msra.mxu0 %v44
    %1457 = vmatprep.subr.mxu0 0.0
    %1458 = vmatpush1.msra.mxu0 %v43
    %1459 = vmatprep.subr.mxu0 0.0
    %1460 = vmatpush1.msra.mxu0 %v42
    %1461 = vmatprep.subr.mxu0 0.0
    %1462 = vmatpush1.msra.mxu0 %v41
    %1463 = vmatprep.subr.mxu0 0.0
    %1464 = vmatpush1.msra.mxu0 %v40
    %1465 = vmatprep.subr.mxu0 0.0
    %1466 = vmatpush1.msra.mxu0 %v39
    %1467 = vmatprep.subr.mxu0 0.0
    %1468 = vmatpush1.msra.mxu0 %v38
    %1469 = vmatprep.subr.mxu0 0.0
    %1470 = vmatpush1.msra.mxu0 %v37
    %1471 = vmatprep.subr.mxu0 0.0
    %1472 = vmatpush2.msra.mxu0 0.0
    %1473 = vmatprep.subr.mxu0 0.0
    %1474 = vmatpush2.msra.mxu0 0.0
    %1475 = vmatprep.subr.mxu0 0.0
    %1476 = vmatpush2.msra.mxu0 0.0
    %1477 = vmatprep.subr.mxu0 0.0
    %1478 = vmatpush2.msra.mxu0 0.0
    %1479 = vmatprep.subr.mxu0 0.0
    %1480 = vmatpush2.msra.mxu0 0.0
    %1481 = vmatprep.subr.mxu0 0.0
    %1482 = vmatpush2.msra.mxu0 0.0
    %1483 = vmatprep.subr.mxu0 0.0
    %1484 = vmatpush2.msra.mxu0 0.0
    %1485 = vmatprep.subr.mxu0 0.0
    %1486 = vmatpush2.msra.mxu0 0.0
    %1487 = vmatprep.subr.mxu0 0.0
    %1488 = vmatpush2.msra.mxu0 0.0
    %1489 = vmatprep.subr.mxu0 0.0
    %1490 = vmatpush2.msra.mxu0 0.0
    %1491 = vmatprep.subr.mxu0 0.0
    %1492 = vmatpush2.msra.mxu0 0.0
    %1493 = vmatprep.subr.mxu0 0.0
    %1494 = vmatpush2.msra.mxu0 0.0
    %1495 = vmatprep.subr.mxu0 0.0
    %1496 = vmatpush2.msra.mxu0 0.0
    %1497 = vmatprep.subr.mxu0 0.0
    %1498 = vmatpush2.msra.mxu0 0.0
    %1499 = vmatprep.subr.mxu0 0.0
    %1500 = vmatpush2.msra.mxu0 0.0
    %1501 = vmatprep.subr.mxu0 0.0
    %1502 = vmatpush2.msra.mxu0 0.0
    %1503 = vmatprep.mubr.f32.mxu0 0.0
    %1504 = vmatmul.mubr.f32.gmra.mxu0 %v1431
    %v1505 = vpop.f32.mrf.mxu0
    %v1506 = vadd.f32 %v1438, %v1505
    %v1507 = vpop.f32.mrf.mxu0
    %1508 = vmatprep.mubr.f32.mxu0 0.0
    %1509 = vmatmul.mubr.f32.gmra.mxu0 %v1432
    %v1510 = vpop.f32.mrf.mxu0
    %v1511 = vadd.f32 %v1438, %v1510
    %v1512 = vpop.f32.mrf.mxu0
    %1513 = vmatprep.mubr.f32.mxu0 0.0
    %1514 = vmatmul.mubr.f32.gmra.mxu0 %v1433
    %v1515 = vpop.f32.mrf.mxu0
    %v1516 = vadd.f32 %v1438, %v1515
    %v1517 = vpop.f32.mrf.mxu0
    %1518 = vmatprep.mubr.f32.mxu0 0.0
    %1519 = vmatmul.mubr.f32.gmra.mxu0 %v1434
    %v1520 = vpop.f32.mrf.mxu0
    %v1521 = vadd.f32 %v1438, %v1520
    %v1522 = vpop.f32.mrf.mxu0
    %1523 = vdwg.mxu0
    %v1524 = vadd.f32 %v1326, %v1506
    %v1525 = vadd.f32 %v1327, %v1511
    %v1526 = vadd.f32 %v1328, %v1516
    %v1527 = vadd.f32 %v1329, %v1521
    %v1528 = vsel %vm79, %v1524, 0.0
    %1529 = vadd.xlane.f32.xlu0 %v1528
    %v1530 = vpop.xlane.xlu0 %1529
    %v1531 = vsel %vm79, %v1525, 0.0
    %1532 = vadd.xlane.f32.xlu0 %v1531
    %v1533 = vpop.xlane.xlu0 %1532
    %v1534 = vsel %vm79, %v1526, 0.0
    %1535 = vadd.xlane.f32.xlu0 %v1534
    %v1536 = vpop.xlane.xlu0 %1535
    %v1537 = vsel %vm79, %v1527, 0.0
    %1538 = vadd.xlane.f32.xlu0 %v1537
    %v1539 = vpop.xlane.xlu0 %1538
    %v1540 = vmul.f32 %v1530, %v1273
    %v1541 = vmul.f32 %v1533, %v1273
    %v1542 = vmul.f32 %v1536, %v1273
    %v1543 = vmul.f32 %v1539, %v1273
    %v1544 = vsub.f32 %v1524, %v1540
    %v1545 = vsub.f32 %v1525, %v1541
    %v1546 = vsub.f32 %v1526, %v1542
    %v1547 = vsub.f32 %v1527, %v1543
    %v1548 = vmul.f32 %v1544, %v1544
    %v1549 = vmul.f32 %v1545, %v1545
    %v1550 = vmul.f32 %v1546, %v1546
    %v1551 = vmul.f32 %v1547, %v1547
    %v1552 = vsel %vm79, %v1548, 0.0
    %1553 = vadd.xlane.f32.xlu0 %v1552
    %v1554 = vpop.xlane.xlu0 %1553
    %v1555 = vsel %vm79, %v1549, 0.0
    %1556 = vadd.xlane.f32.xlu0 %v1555
    %v1557 = vpop.xlane.xlu0 %1556
    %v1558 = vsel %vm79, %v1550, 0.0
    %1559 = vadd.xlane.f32.xlu0 %v1558
    %v1560 = vpop.xlane.xlu0 %1559
    %v1561 = vsel %vm79, %v1551, 0.0
    %1562 = vadd.xlane.f32.xlu0 %v1561
    %v1563 = vpop.xlane.xlu0 %1562
    %v1564 = vmul.f32 %v1554, %v1273
    %v1565 = vmul.f32 %v1557, %v1273
    %v1566 = vmul.f32 %v1560, %v1273
    %v1567 = vmul.f32 %v1563, %v1273
    %v1568 = vadd.f32 %v1564, 1e-05
    %v1569 = vadd.f32 %v1565, 1e-05
    %v1570 = vadd.f32 %v1566, 1e-05
    %v1571 = vadd.f32 %v1567, 1e-05
    %v1572 = vrsqrt.pop %v1568
    %v1573 = vrsqrt.pop %v1569
    %v1574 = vrsqrt.pop %v1570
    %v1575 = vrsqrt.pop %v1571
    %v1576 = vmul.f32 %v1544, %v1572
    %v1577 = vmul.f32 %v1545, %v1573
    %v1578 = vmul.f32 %v1546, %v1574
    %v1579 = vmul.f32 %v1547, %v1575
    %v1580 = vlaneseq
    %v1581 = vshrl.u32 %v1580, 7
    %v1582 = vsub.s32 0, %v1581
    %v1583 = vrot.slane %v73, %v1582
    %v1584 = vmul.f32 %v1576, %v1583
    %v1585 = vmul.f32 %v1577, %v1583
    %v1586 = vmul.f32 %v1578, %v1583
    %v1587 = vmul.f32 %v1579, %v1583
    %v1588 = vlaneseq
    %v1589 = vshrl.u32 %v1588, 7
    %v1590 = vsub.s32 0, %v1589
    %v1591 = vrot.slane %v74, %v1590
    %v1592 = vadd.f32 %v1584, %v1591
    %v1593 = vadd.f32 %v1585, %v1591
    %v1594 = vadd.f32 %v1586, %v1591
    %v1595 = vadd.f32 %v1587, %v1591
    %1596 = vst.msk [vmem:[#allocation2] sm:$0xff] %vm79, %v1592
    %1597 = vst.msk [vmem:[#allocation2 + $0x8] sm:$0xff] %vm79, %v1593
    %1598 = vst.msk [vmem:[#allocation2 + $0x10] sm:$0xff] %vm79, %v1594
    %1599 = vst.msk [vmem:[#allocation2 + $0x18] sm:$0xff] %vm79, %v1595
    // Predicated region
    $region14: #{encoder_layer_forward.1} parent=1 // pred_check
      _
    $region15: #{encoder_layer_forward.1} parent=1 // pred_check_branch
      %1601 = sbr.rel (0) target = $region17
    $region16: #{encoder_layer_forward.1} parent=1 // pred_region
      %s1603 = ssub.s32 512, 512
      %1604 = vsyncadd [#allocation3], %s1603
      %s1605 = sshll.u32 [#allocation2], 4
      %s1606 = int_to_ptr.vmem [resolvable:$true] %s1605
      %1611 = dma.vmem_to_hbm [thread:$0]  %s1606, 512, %s3, [#allocation3], 128, 128, 8
    $region17: #{encoder_layer_forward.1} parent=1 // pred_fallthru
      _
    // Predicated region
    $region18: #{encoder_layer_forward.1} parent=1 // pred_check
      _
    $region19: #{encoder_layer_forward.1} parent=1 // pred_check_branch
      %1613 = sbr.rel (0) target = $region21
    $region20: #{encoder_layer_forward.1} parent=1 // pred_region
      %1614 = dma.done [#allocation3], 512
    $region21: #{encoder_layer_forward.1} parent=1 // pred_fallthru
      _
    %1615 = vsyncpa [#allocation3], 1

</llo_original>
